<compile_context>
chip_gen: v7x
topology: tpu7x:2x2x1
jax: 0.10.0
libtpu: 0.0.40
codegen_flags: <defaults>
</compile_context>

<pallas_src>
import numpy as np
import jax
import jax.numpy as jnp
from jax.experimental import pallas as pl
from jax.experimental.pallas import tpu as pltpu

_K0 = 0.7978845608028654        # sqrt(2/pi)
_K0K1 = _K0 * 0.044715          # sqrt(2/pi) * 0.044715


def _gelu(x):
    """tanh-form GELU: 0.5*x*(1+tanh(sqrt(2/pi)*(x + 0.044715 x^3))).

    ~5 VALU ops per element (mul, FMA, mul, FMA, mul) + one EUP tanh, vs the
    ~14 VALU ops of the A&S-erf form.  Max deviation from exact-erf GELU is
    ~3e-4, well inside the test tolerance.
    """
    inner = x * (_K0 + _K0K1 * (x * x))
    return x * (0.5 + 0.5 * jnp.tanh(inner))


def _make_kernel(num_layers):
    """Fused FourierMLP kernel. Operands:
       cond (TB,1) f32, x (TB,in_dim) f32, vec (n_vec,C) f32 [coeff/phase/biases],
       w_in (in_dim,C) bf16, w_sq (Lsq,C,C) bf16, w_out (C,out_pad) bf16,
       b_out (1,out_pad) f32."""
    L = num_layers

    def kernel(cond_ref, x_ref, vec_ref, w_in_ref, w_sq_ref, w_out_ref,
               b_out_ref, o_ref):
        def vec(r):
            # Static (1, C) row view; the + below is a fused sublane-broadcast
            # add, no (TB, C) broadcast temporary is materialized.
            return vec_ref[pl.ds(r, 1), :]

        def mm(a, w):
            # Single-pass MXU: bf16 x bf16 -> f32 accumulation.
            return jnp.dot(a.astype(jnp.bfloat16), w,
                           preferred_element_type=jnp.float32)

        cond = cond_ref[...]                  # (TB, 1) f32
        x = x_ref[...]                        # (TB, in_dim) f32

        # Fourier time embedding (kept in f32: coeff reaches 100, so the
        # angle needs full precision before sin/cos).
        ang = vec(0) * cond + vec(1)          # (TB, C)
        s = jnp.sin(ang)
        c = jnp.cos(ang)

        # input_embed: (Linear -> GELU) x (1 + L)
        e = _gelu(mm(x, w_in_ref[...]) + vec(2))
        for l in range(L):
            e = _gelu(mm(e, w_sq_ref[l]) + vec(3 + l))

        # timestep_embed: the (2C,C) first linear is split into sin/cos
        # halves (two clean 128x128 matmuls), then (Linear -> GELU) x L.
        h = _gelu(mm(s, w_sq_ref[L]) + mm(c, w_sq_ref[L + 1]) + vec(3 + L))
        for l in range(L):
            h = _gelu(mm(h, w_sq_ref[L + 2 + l]) + vec(4 + L + l))

        # layers: GELU(concat([e, h])) == concat([GELU(e), GELU(h)]); the
        # following (2C,C) linear is split into two (C,C) matmuls.
        ge = _gelu(e)
        gh = _gelu(h)
        z = _gelu(mm(ge, w_sq_ref[2 * L + 2]) + mm(gh, w_sq_ref[2 * L + 3])
                  + vec(4 + 2 * L))
        for l in range(L - 1):
            z = _gelu(mm(z, w_sq_ref[2 * L + 4 + l]) + vec(5 + 2 * L + l))

        # Final linear, lane-dense (out_dim zero-padded to out_pad).
        o_ref[...] = (mm(z, w_out_ref[...]) + b_out_ref[...]).astype(o_ref.dtype)

    return kernel


def init_params(key, in_dim, out_dim, channels=128, num_layers=2, zero_init=True):
    """Deterministic parameters matching FourierMLP.__init__ shapes (flat list:
    coeff, phase, then (W, b) pairs in module order, W stored (in, out))."""
    C = channels
    keys = iter(jax.random.split(key, 64))
    params = []

    coeff = jnp.linspace(0.1, 100.0, C, dtype=jnp.float32)[None, :]      # (1, C)
    phase = jax.random.normal(next(keys), (1, C), dtype=jnp.float32)     # (1, C)
    params += [coeff, phase]

    def make_linear(fan_in, fan_out, zero=False):
        kw, kb = jax.random.split(next(keys))
        if zero:
            return (jnp.zeros((fan_in, fan_out), jnp.float32),
                    jnp.zeros((1, fan_out), jnp.float32))
        bound = 1.0 / float(np.sqrt(fan_in))
        w = jax.random.uniform(kw, (fan_in, fan_out), jnp.float32, -bound, bound)
        b = jax.random.uniform(kb, (1, fan_out), jnp.float32, -bound, bound)
        return w, b

    # input_embed
    params += list(make_linear(in_dim, C))
    for _ in range(num_layers):
        params += list(make_linear(C, C))
    # timestep_embed
    params += list(make_linear(2 * C, C))
    for _ in range(num_layers):
        params += list(make_linear(C, C))
    # layers
    params += list(make_linear(2 * C, C))
    for _ in range(num_layers - 1):
        params += list(make_linear(C, C))
    params += list(make_linear(C, out_dim, zero=zero_init))
    return params


def pack_params(params, num_layers, channels, out_dim):
    """Repack the flat (torch-ordered) param list into a few dense operands.

    Weights are cast to bf16 (single-pass MXU inputs); coeff/phase/biases stay
    f32 (accurate angles, f32 bias adds on the f32 accumulators)."""
    C = channels
    L = num_layers
    coeff, phase = params[0], params[1]
    ws = params[2:]
    pairs = [(ws[2 * i], ws[2 * i + 1]) for i in range(len(ws) // 2)]
    it = iter(pairs)

    sq = []
    vec = [coeff.reshape(1, C), phase.reshape(1, C)]

    # input_embed
    w_in, b_in0 = next(it)
    vec.append(b_in0.reshape(1, C))
    for _ in range(L):
        w, b = next(it)
        sq.append(w)
        vec.append(b.reshape(1, C))
    # timestep_embed: split the (2C, C) first weight into sin / cos halves
    w_t0, b_t0 = next(it)
    sq_t = [w_t0[:C], w_t0[C:]]
    vec.append(b_t0.reshape(1, C))
    t_sq = []
    for _ in range(L):
        w, b = next(it)
        t_sq.append(w)
        vec.append(b.reshape(1, C))
    # layers: split the (2C, C) first weight into e / h halves
    w_l0, b_l0 = next(it)
    sq_l = [w_l0[:C], w_l0[C:]]
    vec.append(b_l0.reshape(1, C))
    l_sq = []
    for _ in range(L - 1):
        w, b = next(it)
        l_sq.append(w)
        vec.append(b.reshape(1, C))
    w_out, b_out = next(it)

    sq_all = sq + sq_t + t_sq + sq_l + l_sq            # (3L + 3) square weights
    w_sq = jnp.stack(sq_all, axis=0).astype(jnp.bfloat16)   # (Lsq, C, C) bf16
    vec_stack = jnp.concatenate(vec, axis=0)                 # (4 + 3L, C) f32
    w_in_b = w_in.astype(jnp.bfloat16)                       # (in_dim, C) bf16

    # Lane-dense final projection: pad out_dim up to a multiple of 128.
    out_pad = ((out_dim + 127) // 128) * 128
    w_out_p = jnp.zeros((C, out_pad), jnp.float32).at[:, :out_dim].set(
        w_out).astype(jnp.bfloat16)
    b_out_p = jnp.zeros((1, out_pad), jnp.float32).at[:, :out_dim].set(
        b_out.reshape(1, -1))
    return vec_stack, w_in_b, w_sq, w_out_p, b_out_p, out_pad


def _round_up(a, m):
    return ((a + m - 1) // m) * m


def fourier_mlp_forward(cond, inputs, params, out_shape, num_layers=2,
                        channels=128):
    """Pallas-backed forward.  cond: scalar or (B,)-like; inputs: (B, *in_shape)."""
    B = inputs.shape[0]
    in_dim = int(np.prod(inputs.shape[1:]))
    out_dim = int(np.prod(out_shape))
    C = channels

    x = inputs.reshape(B, -1).astype(jnp.float32)
    cond2 = jnp.broadcast_to(jnp.reshape(cond, (-1, 1)).astype(jnp.float32), (B, 1))

    vec, w_in, w_sq, w_out_p, b_out_p, out_pad = pack_params(
        params, num_layers, channels, out_dim)
    n_vec = vec.shape[0]
    Lsq = w_sq.shape[0]

    # Batch tiling:
    #  * at least 2 (and an even number of) grid steps whenever B > 8, so both
    #    v7x TensorCores get work (the resident weights are <1 MiB, duplicating
    #    them per core is free),
    #  * tile cap of 1024 rows amortizes the ~0.35us per-step overhead on
    #    v5e/v6e while keeping the per-step working set (~8-16 MiB: resident
    #    bf16 weights + double-buffered cond/x/out + ~10 live (TB,128) f32
    #    intermediates) well inside the 48 MiB VMEM budget below (itself under
    #    the 64 MiB v7x physical VMEM).
    TB_CAP = 1024
    n_tiles = max(1, -(-B // TB_CAP))
    if n_tiles == 1 and B > 8:
        n_tiles = 2
    elif n_tiles > 1 and n_tiles % 2 == 1:
        n_tiles += 1
    TB = _round_up(-(-B // n_tiles), 8)
    B_pad = _round_up(B, TB)
    if B_pad != B:
        x = jnp.pad(x, ((0, B_pad - B), (0, 0)))
        cond2 = jnp.pad(cond2, ((0, B_pad - B), (0, 0)))
    grid = (B_pad // TB,)

    in_specs = [
        pl.BlockSpec((TB, 1), lambda i: (i, 0)),               # cond
        pl.BlockSpec((TB, in_dim), lambda i: (i, 0)),          # x
        pl.BlockSpec((n_vec, C), lambda i: (0, 0)),            # coeff/phase/biases (resident)
        pl.BlockSpec(w_in.shape, lambda i: (0, 0)),            # (in_dim, C) bf16 (resident)
        pl.BlockSpec((Lsq, C, C), lambda i: (0, 0, 0)),        # stacked square weights (resident)
        pl.BlockSpec((C, out_pad), lambda i: (0, 0)),          # final weight (resident)
        pl.BlockSpec((1, out_pad), lambda i: (0, 0)),          # final bias (resident)
    ]
    out_specs = pl.BlockSpec((TB, out_pad), lambda i: (i, 0))

    out = pl.pallas_call(
        _make_kernel(num_layers),
        out_shape=jax.ShapeDtypeStruct((B_pad, out_pad), jnp.float32),
        grid_spec=pl.GridSpec(grid=grid, in_specs=in_specs, out_specs=out_specs),
        compiler_params=pltpu.CompilerParams(
            # Batch axis is embarrassingly parallel; on v7x this lets the two
            # TensorCores split the (always even for B>8) grid.  If a given
            # toolchain does not shard "parallel" across cores, switch to
            # pltpu.CORE_PARALLEL here.
            dimension_semantics=("parallel",),
            vmem_limit_bytes=48 * 1024 * 1024,
        ),
    )(cond2, x, vec, w_in, w_sq, w_out_p, b_out_p)

    return out[:B, :out_dim].reshape((B,) + tuple(out_shape))


def fourier_mlp_reference(cond, inputs, params, out_shape, num_layers=2):
    """Pure-JAX reference (f32 weights, exact erf GELU) mirroring the PyTorch
    forward."""
    B = inputs.shape[0]
    x = inputs.reshape(B, -1).astype(jnp.float32)
    cond2 = jnp.broadcast_to(jnp.reshape(cond, (-1, 1)).astype(jnp.float32), (B, 1))
    coeff, phase = params[0], params[1]
    ws = params[2:]
    gelu = lambda v: jax.nn.gelu(v, approximate=False)

    ang = coeff * cond2 + phase
    fourier = jnp.concatenate([jnp.sin(ang), jnp.cos(ang)], axis=-1)

    idx = [0]

    def take():
        w, b = ws[idx[0]], ws[idx[0] + 1]
        idx[0] += 2
        return w, b

    e = x
    for _ in range(1 + num_layers):
        w, b = take()
        e = gelu(e @ w + b)
    h = fourier
    for _ in range(1 + num_layers):
        w, b = take()
        h = gelu(h @ w + b)
    z = gelu(jnp.concatenate([e, h], axis=-1))
    for _ in range(num_layers):
        w, b = take()
        z = gelu(z @ w + b)
    w, b = take()
    out = z @ w + b
    return out.reshape((-1,) + tuple(out_shape))


if __name__ == "__main__":
    key = jax.random.PRNGKey(0)
    k_params, k_x, k_t = jax.random.split(key, 3)

    B = 8
    in_shape = (4, 4)      # prod = 16
    out_shape = (4,)       # prod = 4
    channels = 128
    num_layers = 2
    in_dim = int(np.prod(in_shape))
    out_dim = int(np.prod(out_shape))

    # zero_init=False so the final layer is non-trivial and the numeric check
    # exercises every op (the module default zero_init=True is also reproduced
    # correctly if enabled — the output is exactly zero).
    params = init_params(k_params, in_dim, out_dim, channels, num_layers,
                         zero_init=False)

    inputs = jax.random.normal(k_x, (B,) + in_shape, dtype=jnp.float32)
    cond = jax.random.uniform(k_t, (B,), dtype=jnp.float32)

    out = fourier_mlp_forward(cond, inputs, params, out_shape, num_layers,
                              channels)
    out = jax.block_until_ready(out)

    ref = fourier_mlp_reference(cond, inputs, params, out_shape, num_layers)
    assert out.shape == (B,) + out_shape, out.shape
    # Tolerance covers the intentional precision trade-offs: bf16 MXU inputs
    # (f32 accumulation) over 12 chained matmuls plus the tanh-form GELU
    # (~3e-4 max deviation from exact erf) in 11 activations, compared against
    # a full-f32 / exact-erf reference.
    np.testing.assert_allclose(np.asarray(out), np.asarray(ref),
                               rtol=2e-2, atol=2e-2)
    print("KERNEL_OK")
</pallas_src>

<mosaic_0001>
module attributes {stable_mosaic.version = 11 : i64} {
  func.func @kernel(%arg0: i32, %arg1: memref<8x1xf32, #tpu.memory_space<vmem>>, %arg2: memref<8x16xf32, #tpu.memory_space<vmem>>, %arg3: memref<10x128xf32, #tpu.memory_space<vmem>>, %arg4: memref<16x128xbf16, #tpu.memory_space<vmem>>, %arg5: memref<9x128x128xbf16, #tpu.memory_space<vmem>>, %arg6: memref<128x128xbf16, #tpu.memory_space<vmem>>, %arg7: memref<1x128xf32, #tpu.memory_space<vmem>>, %arg8: memref<8x128xf32, #tpu.memory_space<vmem>>) attributes {dimension_semantics = [#tpu.dimension_semantics<parallel>], iteration_bounds = array<i64: 1>, scalar_prefetch = 0 : i64, scratch_operands = 0 : i64, tpu.core_type = #tpu.core_type<tc>, window_params = [{transform_indices = @transform_0, window_bounds = array<i64: 8, 1>}, {transform_indices = @transform_1, window_bounds = array<i64: 8, 16>}, {pipeline_mode = #tpu.pipeline_mode<synchronous>, transform_indices = @transform_2, window_bounds = array<i64: 10, 128>}, {pipeline_mode = #tpu.pipeline_mode<synchronous>, transform_indices = @transform_3, window_bounds = array<i64: 16, 128>}, {pipeline_mode = #tpu.pipeline_mode<synchronous>, transform_indices = @transform_4, window_bounds = array<i64: 9, 128, 128>}, {pipeline_mode = #tpu.pipeline_mode<synchronous>, transform_indices = @transform_5, window_bounds = array<i64: 128, 128>}, {pipeline_mode = #tpu.pipeline_mode<synchronous>, transform_indices = @transform_6, window_bounds = array<i64: 1, 128>}, {transform_indices = @transform_7, window_bounds = array<i64: 8, 128>}]} {
    %c0 = arith.constant 0 : index
    %c0_0 = arith.constant 0 : index
    %0 = vector.load %arg1[%c0, %c0_0] : memref<8x1xf32, #tpu.memory_space<vmem>>, vector<8x1xf32>
    %c0_1 = arith.constant 0 : index
    %c0_2 = arith.constant 0 : index
    %1 = vector.load %arg2[%c0_1, %c0_2] : memref<8x16xf32, #tpu.memory_space<vmem>>, vector<8x16xf32>
    %c0_3 = arith.constant 0 : index
    %c0_4 = arith.constant 0 : index
    %2 = vector.load %arg3[%c0_3, %c0_4] : memref<10x128xf32, #tpu.memory_space<vmem>>, vector<1x128xf32>
    %3 = vector.broadcast %2 : vector<1x128xf32> to vector<8x128xf32>
    %4 = vector.broadcast %0 : vector<8x1xf32> to vector<8x128xf32>
    %5 = arith.mulf %3, %4 : vector<8x128xf32>
    %c1 = arith.constant 1 : index
    %c0_5 = arith.constant 0 : index
    %6 = vector.load %arg3[%c1, %c0_5] : memref<10x128xf32, #tpu.memory_space<vmem>>, vector<1x128xf32>
    %7 = vector.broadcast %6 : vector<1x128xf32> to vector<8x128xf32>
    %8 = arith.addf %5, %7 : vector<8x128xf32>
    %9 = math.sin %8 : vector<8x128xf32>
    %10 = math.cos %8 : vector<8x128xf32>
    %c0_6 = arith.constant 0 : index
    %c0_7 = arith.constant 0 : index
    %11 = vector.load %arg4[%c0_6, %c0_7] : memref<16x128xbf16, #tpu.memory_space<vmem>>, vector<16x128xbf16>
    %12 = arith.truncf %1 : vector<8x16xf32> to vector<8x16xbf16>
    %cst = arith.constant dense<0.000000e+00> : vector<8x128xf32>
    %13 = tpu.matmul %12, %11, %cst {dimension_numbers = #tpu.dot_dimension_numbers<[1], [0], [0], [1], [0, 0, 1, 1], [], []>} : vector<8x16xbf16>, vector<16x128xbf16>, vector<8x128xf32> -> vector<8x128xf32>
    %c2 = arith.constant 2 : index
    %c0_8 = arith.constant 0 : index
    %14 = vector.load %arg3[%c2, %c0_8] : memref<10x128xf32, #tpu.memory_space<vmem>>, vector<1x128xf32>
    %15 = vector.broadcast %14 : vector<1x128xf32> to vector<8x128xf32>
    %16 = arith.addf %13, %15 : vector<8x128xf32>
    %17 = arith.mulf %16, %16 : vector<8x128xf32>
    %cst_9 = arith.constant 0.0356774069 : f32
    %18 = vector.broadcast %cst_9 : f32 to vector<8x128xf32>
    %19 = arith.mulf %18, %17 : vector<8x128xf32>
    %cst_10 = arith.constant 0.797884583 : f32
    %20 = vector.broadcast %cst_10 : f32 to vector<8x128xf32>
    %21 = arith.addf %20, %19 : vector<8x128xf32>
    %22 = arith.mulf %16, %21 : vector<8x128xf32>
    %23 = math.tanh %22 : vector<8x128xf32>
    %cst_11 = arith.constant 5.000000e-01 : f32
    %24 = vector.broadcast %cst_11 : f32 to vector<8x128xf32>
    %25 = arith.mulf %24, %23 : vector<8x128xf32>
    %cst_12 = arith.constant 5.000000e-01 : f32
    %26 = vector.broadcast %cst_12 : f32 to vector<8x128xf32>
    %27 = arith.addf %26, %25 : vector<8x128xf32>
    %28 = arith.mulf %16, %27 : vector<8x128xf32>
    %c0_13 = arith.constant 0 : index
    %c0_14 = arith.constant 0 : index
    %c0_15 = arith.constant 0 : index
    %29 = vector.load %arg5[%c0_13, %c0_14, %c0_15] : memref<9x128x128xbf16, #tpu.memory_space<vmem>>, vector<1x128x128xbf16>
    %30 = vector.shape_cast %29 : vector<1x128x128xbf16> to vector<128x128xbf16>
    %31 = arith.truncf %28 : vector<8x128xf32> to vector<8x128xbf16>
    %cst_16 = arith.constant dense<0.000000e+00> : vector<8x128xf32>
    %32 = tpu.matmul %31, %30, %cst_16 {dimension_numbers = #tpu.dot_dimension_numbers<[1], [0], [0], [1], [0, 0, 1, 1], [], []>} : vector<8x128xbf16>, vector<128x128xbf16>, vector<8x128xf32> -> vector<8x128xf32>
    %c3 = arith.constant 3 : index
    %c0_17 = arith.constant 0 : index
    %33 = vector.load %arg3[%c3, %c0_17] : memref<10x128xf32, #tpu.memory_space<vmem>>, vector<1x128xf32>
    %34 = vector.broadcast %33 : vector<1x128xf32> to vector<8x128xf32>
    %35 = arith.addf %32, %34 : vector<8x128xf32>
    %36 = arith.mulf %35, %35 : vector<8x128xf32>
    %cst_18 = arith.constant 0.0356774069 : f32
    %37 = vector.broadcast %cst_18 : f32 to vector<8x128xf32>
    %38 = arith.mulf %37, %36 : vector<8x128xf32>
    %cst_19 = arith.constant 0.797884583 : f32
    %39 = vector.broadcast %cst_19 : f32 to vector<8x128xf32>
    %40 = arith.addf %39, %38 : vector<8x128xf32>
    %41 = arith.mulf %35, %40 : vector<8x128xf32>
    %42 = math.tanh %41 : vector<8x128xf32>
    %cst_20 = arith.constant 5.000000e-01 : f32
    %43 = vector.broadcast %cst_20 : f32 to vector<8x128xf32>
    %44 = arith.mulf %43, %42 : vector<8x128xf32>
    %cst_21 = arith.constant 5.000000e-01 : f32
    %45 = vector.broadcast %cst_21 : f32 to vector<8x128xf32>
    %46 = arith.addf %45, %44 : vector<8x128xf32>
    %47 = arith.mulf %35, %46 : vector<8x128xf32>
    %c1_22 = arith.constant 1 : index
    %c0_23 = arith.constant 0 : index
    %c0_24 = arith.constant 0 : index
    %48 = vector.load %arg5[%c1_22, %c0_23, %c0_24] : memref<9x128x128xbf16, #tpu.memory_space<vmem>>, vector<1x128x128xbf16>
    %49 = vector.shape_cast %48 : vector<1x128x128xbf16> to vector<128x128xbf16>
    %50 = arith.truncf %47 : vector<8x128xf32> to vector<8x128xbf16>
    %cst_25 = arith.constant dense<0.000000e+00> : vector<8x128xf32>
    %51 = tpu.matmul %50, %49, %cst_25 {dimension_numbers = #tpu.dot_dimension_numbers<[1], [0], [0], [1], [0, 0, 1, 1], [], []>} : vector<8x128xbf16>, vector<128x128xbf16>, vector<8x128xf32> -> vector<8x128xf32>
    %c4 = arith.constant 4 : index
    %c0_26 = arith.constant 0 : index
    %52 = vector.load %arg3[%c4, %c0_26] : memref<10x128xf32, #tpu.memory_space<vmem>>, vector<1x128xf32>
    %53 = vector.broadcast %52 : vector<1x128xf32> to vector<8x128xf32>
    %54 = arith.addf %51, %53 : vector<8x128xf32>
    %55 = arith.mulf %54, %54 : vector<8x128xf32>
    %cst_27 = arith.constant 0.0356774069 : f32
    %56 = vector.broadcast %cst_27 : f32 to vector<8x128xf32>
    %57 = arith.mulf %56, %55 : vector<8x128xf32>
    %cst_28 = arith.constant 0.797884583 : f32
    %58 = vector.broadcast %cst_28 : f32 to vector<8x128xf32>
    %59 = arith.addf %58, %57 : vector<8x128xf32>
    %60 = arith.mulf %54, %59 : vector<8x128xf32>
    %61 = math.tanh %60 : vector<8x128xf32>
    %cst_29 = arith.constant 5.000000e-01 : f32
    %62 = vector.broadcast %cst_29 : f32 to vector<8x128xf32>
    %63 = arith.mulf %62, %61 : vector<8x128xf32>
    %cst_30 = arith.constant 5.000000e-01 : f32
    %64 = vector.broadcast %cst_30 : f32 to vector<8x128xf32>
    %65 = arith.addf %64, %63 : vector<8x128xf32>
    %66 = arith.mulf %54, %65 : vector<8x128xf32>
    %c2_31 = arith.constant 2 : index
    %c0_32 = arith.constant 0 : index
    %c0_33 = arith.constant 0 : index
    %67 = vector.load %arg5[%c2_31, %c0_32, %c0_33] : memref<9x128x128xbf16, #tpu.memory_space<vmem>>, vector<1x128x128xbf16>
    %68 = vector.shape_cast %67 : vector<1x128x128xbf16> to vector<128x128xbf16>
    %69 = arith.truncf %9 : vector<8x128xf32> to vector<8x128xbf16>
    %cst_34 = arith.constant dense<0.000000e+00> : vector<8x128xf32>
    %70 = tpu.matmul %69, %68, %cst_34 {dimension_numbers = #tpu.dot_dimension_numbers<[1], [0], [0], [1], [0, 0, 1, 1], [], []>} : vector<8x128xbf16>, vector<128x128xbf16>, vector<8x128xf32> -> vector<8x128xf32>
    %c3_35 = arith.constant 3 : index
    %c0_36 = arith.constant 0 : index
    %c0_37 = arith.constant 0 : index
    %71 = vector.load %arg5[%c3_35, %c0_36, %c0_37] : memref<9x128x128xbf16, #tpu.memory_space<vmem>>, vector<1x128x128xbf16>
    %72 = vector.shape_cast %71 : vector<1x128x128xbf16> to vector<128x128xbf16>
    %73 = arith.truncf %10 : vector<8x128xf32> to vector<8x128xbf16>
    %cst_38 = arith.constant dense<0.000000e+00> : vector<8x128xf32>
    %74 = tpu.matmul %73, %72, %cst_38 {dimension_numbers = #tpu.dot_dimension_numbers<[1], [0], [0], [1], [0, 0, 1, 1], [], []>} : vector<8x128xbf16>, vector<128x128xbf16>, vector<8x128xf32> -> vector<8x128xf32>
    %75 = arith.addf %70, %74 : vector<8x128xf32>
    %c5 = arith.constant 5 : index
    %c0_39 = arith.constant 0 : index
    %76 = vector.load %arg3[%c5, %c0_39] : memref<10x128xf32, #tpu.memory_space<vmem>>, vector<1x128xf32>
    %77 = vector.broadcast %76 : vector<1x128xf32> to vector<8x128xf32>
    %78 = arith.addf %75, %77 : vector<8x128xf32>
    %79 = arith.mulf %78, %78 : vector<8x128xf32>
    %cst_40 = arith.constant 0.0356774069 : f32
    %80 = vector.broadcast %cst_40 : f32 to vector<8x128xf32>
    %81 = arith.mulf %80, %79 : vector<8x128xf32>
    %cst_41 = arith.constant 0.797884583 : f32
    %82 = vector.broadcast %cst_41 : f32 to vector<8x128xf32>
    %83 = arith.addf %82, %81 : vector<8x128xf32>
    %84 = arith.mulf %78, %83 : vector<8x128xf32>
    %85 = math.tanh %84 : vector<8x128xf32>
    %cst_42 = arith.constant 5.000000e-01 : f32
    %86 = vector.broadcast %cst_42 : f32 to vector<8x128xf32>
    %87 = arith.mulf %86, %85 : vector<8x128xf32>
    %cst_43 = arith.constant 5.000000e-01 : f32
    %88 = vector.broadcast %cst_43 : f32 to vector<8x128xf32>
    %89 = arith.addf %88, %87 : vector<8x128xf32>
    %90 = arith.mulf %78, %89 : vector<8x128xf32>
    %c4_44 = arith.constant 4 : index
    %c0_45 = arith.constant 0 : index
    %c0_46 = arith.constant 0 : index
    %91 = vector.load %arg5[%c4_44, %c0_45, %c0_46] : memref<9x128x128xbf16, #tpu.memory_space<vmem>>, vector<1x128x128xbf16>
    %92 = vector.shape_cast %91 : vector<1x128x128xbf16> to vector<128x128xbf16>
    %93 = arith.truncf %90 : vector<8x128xf32> to vector<8x128xbf16>
    %cst_47 = arith.constant dense<0.000000e+00> : vector<8x128xf32>
    %94 = tpu.matmul %93, %92, %cst_47 {dimension_numbers = #tpu.dot_dimension_numbers<[1], [0], [0], [1], [0, 0, 1, 1], [], []>} : vector<8x128xbf16>, vector<128x128xbf16>, vector<8x128xf32> -> vector<8x128xf32>
    %c6 = arith.constant 6 : index
    %c0_48 = arith.constant 0 : index
    %95 = vector.load %arg3[%c6, %c0_48] : memref<10x128xf32, #tpu.memory_space<vmem>>, vector<1x128xf32>
    %96 = vector.broadcast %95 : vector<1x128xf32> to vector<8x128xf32>
    %97 = arith.addf %94, %96 : vector<8x128xf32>
    %98 = arith.mulf %97, %97 : vector<8x128xf32>
    %cst_49 = arith.constant 0.0356774069 : f32
    %99 = vector.broadcast %cst_49 : f32 to vector<8x128xf32>
    %100 = arith.mulf %99, %98 : vector<8x128xf32>
    %cst_50 = arith.constant 0.797884583 : f32
    %101 = vector.broadcast %cst_50 : f32 to vector<8x128xf32>
    %102 = arith.addf %101, %100 : vector<8x128xf32>
    %103 = arith.mulf %97, %102 : vector<8x128xf32>
    %104 = math.tanh %103 : vector<8x128xf32>
    %cst_51 = arith.constant 5.000000e-01 : f32
    %105 = vector.broadcast %cst_51 : f32 to vector<8x128xf32>
    %106 = arith.mulf %105, %104 : vector<8x128xf32>
    %cst_52 = arith.constant 5.000000e-01 : f32
    %107 = vector.broadcast %cst_52 : f32 to vector<8x128xf32>
    %108 = arith.addf %107, %106 : vector<8x128xf32>
    %109 = arith.mulf %97, %108 : vector<8x128xf32>
    %c5_53 = arith.constant 5 : index
    %c0_54 = arith.constant 0 : index
    %c0_55 = arith.constant 0 : index
    %110 = vector.load %arg5[%c5_53, %c0_54, %c0_55] : memref<9x128x128xbf16, #tpu.memory_space<vmem>>, vector<1x128x128xbf16>
    %111 = vector.shape_cast %110 : vector<1x128x128xbf16> to vector<128x128xbf16>
    %112 = arith.truncf %109 : vector<8x128xf32> to vector<8x128xbf16>
    %cst_56 = arith.constant dense<0.000000e+00> : vector<8x128xf32>
    %113 = tpu.matmul %112, %111, %cst_56 {dimension_numbers = #tpu.dot_dimension_numbers<[1], [0], [0], [1], [0, 0, 1, 1], [], []>} : vector<8x128xbf16>, vector<128x128xbf16>, vector<8x128xf32> -> vector<8x128xf32>
    %c7 = arith.constant 7 : index
    %c0_57 = arith.constant 0 : index
    %114 = vector.load %arg3[%c7, %c0_57] : memref<10x128xf32, #tpu.memory_space<vmem>>, vector<1x128xf32>
    %115 = vector.broadcast %114 : vector<1x128xf32> to vector<8x128xf32>
    %116 = arith.addf %113, %115 : vector<8x128xf32>
    %117 = arith.mulf %116, %116 : vector<8x128xf32>
    %cst_58 = arith.constant 0.0356774069 : f32
    %118 = vector.broadcast %cst_58 : f32 to vector<8x128xf32>
    %119 = arith.mulf %118, %117 : vector<8x128xf32>
    %cst_59 = arith.constant 0.797884583 : f32
    %120 = vector.broadcast %cst_59 : f32 to vector<8x128xf32>
    %121 = arith.addf %120, %119 : vector<8x128xf32>
    %122 = arith.mulf %116, %121 : vector<8x128xf32>
    %123 = math.tanh %122 : vector<8x128xf32>
    %cst_60 = arith.constant 5.000000e-01 : f32
    %124 = vector.broadcast %cst_60 : f32 to vector<8x128xf32>
    %125 = arith.mulf %124, %123 : vector<8x128xf32>
    %cst_61 = arith.constant 5.000000e-01 : f32
    %126 = vector.broadcast %cst_61 : f32 to vector<8x128xf32>
    %127 = arith.addf %126, %125 : vector<8x128xf32>
    %128 = arith.mulf %116, %127 : vector<8x128xf32>
    %129 = arith.mulf %66, %66 : vector<8x128xf32>
    %cst_62 = arith.constant 0.0356774069 : f32
    %130 = vector.broadcast %cst_62 : f32 to vector<8x128xf32>
    %131 = arith.mulf %130, %129 : vector<8x128xf32>
    %cst_63 = arith.constant 0.797884583 : f32
    %132 = vector.broadcast %cst_63 : f32 to vector<8x128xf32>
    %133 = arith.addf %132, %131 : vector<8x128xf32>
    %134 = arith.mulf %66, %133 : vector<8x128xf32>
    %135 = math.tanh %134 : vector<8x128xf32>
    %cst_64 = arith.constant 5.000000e-01 : f32
    %136 = vector.broadcast %cst_64 : f32 to vector<8x128xf32>
    %137 = arith.mulf %136, %135 : vector<8x128xf32>
    %cst_65 = arith.constant 5.000000e-01 : f32
    %138 = vector.broadcast %cst_65 : f32 to vector<8x128xf32>
    %139 = arith.addf %138, %137 : vector<8x128xf32>
    %140 = arith.mulf %66, %139 : vector<8x128xf32>
    %141 = arith.mulf %128, %128 : vector<8x128xf32>
    %cst_66 = arith.constant 0.0356774069 : f32
    %142 = vector.broadcast %cst_66 : f32 to vector<8x128xf32>
    %143 = arith.mulf %142, %141 : vector<8x128xf32>
    %cst_67 = arith.constant 0.797884583 : f32
    %144 = vector.broadcast %cst_67 : f32 to vector<8x128xf32>
    %145 = arith.addf %144, %143 : vector<8x128xf32>
    %146 = arith.mulf %128, %145 : vector<8x128xf32>
    %147 = math.tanh %146 : vector<8x128xf32>
    %cst_68 = arith.constant 5.000000e-01 : f32
    %148 = vector.broadcast %cst_68 : f32 to vector<8x128xf32>
    %149 = arith.mulf %148, %147 : vector<8x128xf32>
    %cst_69 = arith.constant 5.000000e-01 : f32
    %150 = vector.broadcast %cst_69 : f32 to vector<8x128xf32>
    %151 = arith.addf %150, %149 : vector<8x128xf32>
    %152 = arith.mulf %128, %151 : vector<8x128xf32>
    %c6_70 = arith.constant 6 : index
    %c0_71 = arith.constant 0 : index
    %c0_72 = arith.constant 0 : index
    %153 = vector.load %arg5[%c6_70, %c0_71, %c0_72] : memref<9x128x128xbf16, #tpu.memory_space<vmem>>, vector<1x128x128xbf16>
    %154 = vector.shape_cast %153 : vector<1x128x128xbf16> to vector<128x128xbf16>
    %155 = arith.truncf %140 : vector<8x128xf32> to vector<8x128xbf16>
    %cst_73 = arith.constant dense<0.000000e+00> : vector<8x128xf32>
    %156 = tpu.matmul %155, %154, %cst_73 {dimension_numbers = #tpu.dot_dimension_numbers<[1], [0], [0], [1], [0, 0, 1, 1], [], []>} : vector<8x128xbf16>, vector<128x128xbf16>, vector<8x128xf32> -> vector<8x128xf32>
    %c7_74 = arith.constant 7 : index
    %c0_75 = arith.constant 0 : index
    %c0_76 = arith.constant 0 : index
    %157 = vector.load %arg5[%c7_74, %c0_75, %c0_76] : memref<9x128x128xbf16, #tpu.memory_space<vmem>>, vector<1x128x128xbf16>
    %158 = vector.shape_cast %157 : vector<1x128x128xbf16> to vector<128x128xbf16>
    %159 = arith.truncf %152 : vector<8x128xf32> to vector<8x128xbf16>
    %cst_77 = arith.constant dense<0.000000e+00> : vector<8x128xf32>
    %160 = tpu.matmul %159, %158, %cst_77 {dimension_numbers = #tpu.dot_dimension_numbers<[1], [0], [0], [1], [0, 0, 1, 1], [], []>} : vector<8x128xbf16>, vector<128x128xbf16>, vector<8x128xf32> -> vector<8x128xf32>
    %161 = arith.addf %156, %160 : vector<8x128xf32>
    %c8 = arith.constant 8 : index
    %c0_78 = arith.constant 0 : index
    %162 = vector.load %arg3[%c8, %c0_78] : memref<10x128xf32, #tpu.memory_space<vmem>>, vector<1x128xf32>
    %163 = vector.broadcast %162 : vector<1x128xf32> to vector<8x128xf32>
    %164 = arith.addf %161, %163 : vector<8x128xf32>
    %165 = arith.mulf %164, %164 : vector<8x128xf32>
    %cst_79 = arith.constant 0.0356774069 : f32
    %166 = vector.broadcast %cst_79 : f32 to vector<8x128xf32>
    %167 = arith.mulf %166, %165 : vector<8x128xf32>
    %cst_80 = arith.constant 0.797884583 : f32
    %168 = vector.broadcast %cst_80 : f32 to vector<8x128xf32>
    %169 = arith.addf %168, %167 : vector<8x128xf32>
    %170 = arith.mulf %164, %169 : vector<8x128xf32>
    %171 = math.tanh %170 : vector<8x128xf32>
    %cst_81 = arith.constant 5.000000e-01 : f32
    %172 = vector.broadcast %cst_81 : f32 to vector<8x128xf32>
    %173 = arith.mulf %172, %171 : vector<8x128xf32>
    %cst_82 = arith.constant 5.000000e-01 : f32
    %174 = vector.broadcast %cst_82 : f32 to vector<8x128xf32>
    %175 = arith.addf %174, %173 : vector<8x128xf32>
    %176 = arith.mulf %164, %175 : vector<8x128xf32>
    %c8_83 = arith.constant 8 : index
    %c0_84 = arith.constant 0 : index
    %c0_85 = arith.constant 0 : index
    %177 = vector.load %arg5[%c8_83, %c0_84, %c0_85] : memref<9x128x128xbf16, #tpu.memory_space<vmem>>, vector<1x128x128xbf16>
    %178 = vector.shape_cast %177 : vector<1x128x128xbf16> to vector<128x128xbf16>
    %179 = arith.truncf %176 : vector<8x128xf32> to vector<8x128xbf16>
    %cst_86 = arith.constant dense<0.000000e+00> : vector<8x128xf32>
    %180 = tpu.matmul %179, %178, %cst_86 {dimension_numbers = #tpu.dot_dimension_numbers<[1], [0], [0], [1], [0, 0, 1, 1], [], []>} : vector<8x128xbf16>, vector<128x128xbf16>, vector<8x128xf32> -> vector<8x128xf32>
    %c9 = arith.constant 9 : index
    %c0_87 = arith.constant 0 : index
    %181 = vector.load %arg3[%c9, %c0_87] : memref<10x128xf32, #tpu.memory_space<vmem>>, vector<1x128xf32>
    %182 = vector.broadcast %181 : vector<1x128xf32> to vector<8x128xf32>
    %183 = arith.addf %180, %182 : vector<8x128xf32>
    %184 = arith.mulf %183, %183 : vector<8x128xf32>
    %cst_88 = arith.constant 0.0356774069 : f32
    %185 = vector.broadcast %cst_88 : f32 to vector<8x128xf32>
    %186 = arith.mulf %185, %184 : vector<8x128xf32>
    %cst_89 = arith.constant 0.797884583 : f32
    %187 = vector.broadcast %cst_89 : f32 to vector<8x128xf32>
    %188 = arith.addf %187, %186 : vector<8x128xf32>
    %189 = arith.mulf %183, %188 : vector<8x128xf32>
    %190 = math.tanh %189 : vector<8x128xf32>
    %cst_90 = arith.constant 5.000000e-01 : f32
    %191 = vector.broadcast %cst_90 : f32 to vector<8x128xf32>
    %192 = arith.mulf %191, %190 : vector<8x128xf32>
    %cst_91 = arith.constant 5.000000e-01 : f32
    %193 = vector.broadcast %cst_91 : f32 to vector<8x128xf32>
    %194 = arith.addf %193, %192 : vector<8x128xf32>
    %195 = arith.mulf %183, %194 : vector<8x128xf32>
    %c0_92 = arith.constant 0 : index
    %c0_93 = arith.constant 0 : index
    %196 = vector.load %arg6[%c0_92, %c0_93] : memref<128x128xbf16, #tpu.memory_space<vmem>>, vector<128x128xbf16>
    %197 = arith.truncf %195 : vector<8x128xf32> to vector<8x128xbf16>
    %cst_94 = arith.constant dense<0.000000e+00> : vector<8x128xf32>
    %198 = tpu.matmul %197, %196, %cst_94 {dimension_numbers = #tpu.dot_dimension_numbers<[1], [0], [0], [1], [0, 0, 1, 1], [], []>} : vector<8x128xbf16>, vector<128x128xbf16>, vector<8x128xf32> -> vector<8x128xf32>
    %c0_95 = arith.constant 0 : index
    %c0_96 = arith.constant 0 : index
    %199 = vector.load %arg7[%c0_95, %c0_96] : memref<1x128xf32, #tpu.memory_space<vmem>>, vector<1x128xf32>
    %200 = vector.broadcast %199 : vector<1x128xf32> to vector<8x128xf32>
    %201 = arith.addf %198, %200 : vector<8x128xf32>
    %c0_97 = arith.constant 0 : index
    %c0_98 = arith.constant 0 : index
    %202 = vector.load %arg8[%c0_97, %c0_98] : memref<8x128xf32, #tpu.memory_space<vmem>>, vector<8x128xf32>
    tpu.vector_store %arg8[%c0_97, %c0_98], %201 {strides = array<i32>} : memref<8x128xf32, #tpu.memory_space<vmem>>, vector<8x128xf32>,
    return
  }
  func.func @transform_0(%arg0: i32) -> (i32, i32) {
    %c0_i32 = arith.constant 0 : i32
    %c0_i32_0 = arith.constant 0 : i32
    return %arg0, %c0_i32 : i32, i32
  }
  func.func @transform_1(%arg0: i32) -> (i32, i32) {
    %c0_i32 = arith.constant 0 : i32
    %c0_i32_0 = arith.constant 0 : i32
    return %arg0, %c0_i32 : i32, i32
  }
  func.func @transform_2(%arg0: i32) -> (i32, i32) {
    %c0_i32 = arith.constant 0 : i32
    %c0_i32_0 = arith.constant 0 : i32
    %c0_i32_1 = arith.constant 0 : i32
    return %c0_i32, %c0_i32_0 : i32, i32
  }
  func.func @transform_3(%arg0: i32) -> (i32, i32) {
    %c0_i32 = arith.constant 0 : i32
    %c0_i32_0 = arith.constant 0 : i32
    %c0_i32_1 = arith.constant 0 : i32
    return %c0_i32, %c0_i32_0 : i32, i32
  }
  func.func @transform_4(%arg0: i32) -> (i32, i32, i32) {
    %c0_i32 = arith.constant 0 : i32
    %c0_i32_0 = arith.constant 0 : i32
    %c0_i32_1 = arith.constant 0 : i32
    %c0_i32_2 = arith.constant 0 : i32
    return %c0_i32, %c0_i32_0, %c0_i32_1 : i32, i32, i32
  }
  func.func @transform_5(%arg0: i32) -> (i32, i32) {
    %c0_i32 = arith.constant 0 : i32
    %c0_i32_0 = arith.constant 0 : i32
    %c0_i32_1 = arith.constant 0 : i32
    return %c0_i32, %c0_i32_0 : i32, i32
  }
  func.func @transform_6(%arg0: i32) -> (i32, i32) {
    %c0_i32 = arith.constant 0 : i32
    %c0_i32_0 = arith.constant 0 : i32
    %c0_i32_1 = arith.constant 0 : i32
    return %c0_i32, %c0_i32_0 : i32, i32
  }
  func.func @transform_7(%arg0: i32) -> (i32, i32) {
    %c0_i32 = arith.constant 0 : i32
    %c0_i32_0 = arith.constant 0 : i32
    return %arg0, %c0_i32 : i32, i32
  }
}

</mosaic_0001>

<llo_original>
// kernel: tpu_custom_call.1
$region0: #{tpu_custom_call.1}
  #allocation0 [shape = 'u32[]', space=smem, size = 0x4, offset = 0x4, fixed_abs, tag = 'smem constant byte address 0x4 - core index']
  #allocation1 [shape = 'u32[144,128]{1,0:T(1,128)}', space=vmem, size = 0x12000, scoped, tag = 'internal scratch']
  %s0 = inlined_call_operand.vmem [shape: f32[8,1], index: 0, kind: input, shape index: {}]
  %s1 = inlined_call_operand.hbm [shape: f32[8,16], index: 1, kind: input, shape index: {}]
  %s2 = inlined_call_operand.vmem [shape: f32[10,128], index: 2, kind: input, shape index: {}]
  %s3 = inlined_call_operand.hbm [shape: bf16[16,128], index: 3, kind: input, shape index: {}]
  %s4 = inlined_call_operand.hbm [shape: bf16[9,128,128], index: 4, kind: input, shape index: {}]
  %s5 = inlined_call_operand.hbm [shape: bf16[128,128], index: 5, kind: input, shape index: {}]
  %s6 = inlined_call_operand.vmem [shape: f32[1,128], index: 6, kind: input, shape index: {}]
  %s7 = inlined_call_operand.hbm [shape: f32[8,128], index: 7, kind: output, shape index: {}]
  %s8 = sld [smem:[#allocation0]]
  $region54: #{tpu_custom_call.1} parent=0
    _
  %s10 = ssub.s32 1, %s8
  %s11 = scalar_select 0, %s10, %s8
  $region1: #{tpu_custom_call.1} parent=0
    #allocation2 [shape = 'u8[4096]{0}', space=vmem, size = 0x1000, scoped, tag = 'input window, operand 1, single buffered']
    #allocation3 [shape = 's32[1]{0}', space=sflag, size = 0x4, scoped, tag = 'scoped memory for tpu_custom_call.1']
    #allocation4 [shape = 's32[1]{0}', space=sflag, size = 0x4, scoped, tag = 'scoped memory for tpu_custom_call.1']
    #allocation5 [shape = 'u8[4096]{0}', space=vmem, size = 0x1000, scoped, tag = 'input window, operand 3, single buffered']
    #allocation6 [shape = 's32[1]{0}', space=sflag, size = 0x4, scoped, tag = 'scoped memory for tpu_custom_call.1']
    #allocation7 [shape = 'u8[294912]{0}', space=vmem, size = 0x48000, scoped, tag = 'input window, operand 4, single buffered']
    #allocation8 [shape = 'u8[32768]{0}', space=vmem, size = 0x8000, scoped, tag = 'input window, operand 5, single buffered']
    #allocation9 [shape = 's32[1]{0}', space=sflag, size = 0x4, scoped, tag = 'scoped memory for tpu_custom_call.1']
    #allocation10 [shape = 'u8[4096]{0}', space=vmem, size = 0x1000, scoped, tag = 'output window, operand 0, single buffered']
    %12 = vsyncpa [#allocation3], 0
    %13 = vsyncpa [#allocation6], 0
    %14 = vsyncpa [#allocation9], 0
    %15 = vsyncpa [#allocation4], 0
    // Predicated region
    $region2: #{tpu_custom_call.1} parent=1 // pred_check
      _
    $region3: #{tpu_custom_call.1} parent=1 // pred_check_branch
      %17 = sbr.rel (0) target = $region5
    $region4: #{tpu_custom_call.1} parent=1 // pred_region
      _
    $region5: #{tpu_custom_call.1} parent=1 // pred_fallthru
      _
    // Predicated region
    $region6: #{tpu_custom_call.1} parent=1 // pred_check
      _
    $region7: #{tpu_custom_call.1} parent=1 // pred_check_branch
      %19 = sbr.rel (0) target = $region9
    $region8: #{tpu_custom_call.1} parent=1 // pred_region
      %s21 = ssub.s32 128, 128
      %22 = vsyncadd [#allocation3], %s21
      %s24 = sshll.u32 [#allocation2], 4
      %s25 = int_to_ptr.vmem [resolvable:$true] %s24
      %27 = dma.hbm_to_vmem [thread:$0]  %s1, 128, %s25, [#allocation3]
    $region9: #{tpu_custom_call.1} parent=1 // pred_fallthru
      _
    // Predicated region
    $region10: #{tpu_custom_call.1} parent=1 // pred_check
      _
    $region11: #{tpu_custom_call.1} parent=1 // pred_check_branch
      %29 = sbr.rel (0) target = $region13
    $region12: #{tpu_custom_call.1} parent=1 // pred_region
      _
    $region13: #{tpu_custom_call.1} parent=1 // pred_fallthru
      _
    // Predicated region
    $region14: #{tpu_custom_call.1} parent=1 // pred_check
      _
    $region15: #{tpu_custom_call.1} parent=1 // pred_check_branch
      %31 = sbr.rel (0) target = $region17
    $region16: #{tpu_custom_call.1} parent=1 // pred_region
      %s33 = ssub.s32 128, 128
      %34 = vsyncadd [#allocation6], %s33
      %s35 = sshll.u32 [#allocation5], 4
      %s36 = int_to_ptr.vmem [resolvable:$true] %s35
      %41 = dma.hbm_to_vmem [thread:$0]  %s3, 128, %s36, [#allocation6], 64, 64, 4
    $region17: #{tpu_custom_call.1} parent=1 // pred_fallthru
      _
    // Predicated region
    $region18: #{tpu_custom_call.1} parent=1 // pred_check
      _
    $region19: #{tpu_custom_call.1} parent=1 // pred_check_branch
      %43 = sbr.rel (0) target = $region21
    $region20: #{tpu_custom_call.1} parent=1 // pred_region
      %s45 = ssub.s32 9216, 9216
      %46 = vsyncadd [#allocation6], %s45
      %s47 = sshll.u32 [#allocation7], 4
      %s48 = int_to_ptr.vmem [resolvable:$true] %s47
      %53 = dma.hbm_to_vmem [thread:$0]  %s4, 9216, %s48, [#allocation6], 64, 64, 4
    $region21: #{tpu_custom_call.1} parent=1 // pred_fallthru
      _
    // Predicated region
    $region22: #{tpu_custom_call.1} parent=1 // pred_check
      _
    $region23: #{tpu_custom_call.1} parent=1 // pred_check_branch
      %55 = sbr.rel (0) target = $region25
    $region24: #{tpu_custom_call.1} parent=1 // pred_region
      %s57 = ssub.s32 1024, 1024
      %58 = vsyncadd [#allocation9], %s57
      %s59 = sshll.u32 [#allocation8], 4
      %s60 = int_to_ptr.vmem [resolvable:$true] %s59
      %65 = dma.hbm_to_vmem [thread:$0]  %s5, 1024, %s60, [#allocation9], 64, 64, 4
    $region25: #{tpu_custom_call.1} parent=1 // pred_fallthru
      _
    // Predicated region
    $region26: #{tpu_custom_call.1} parent=1 // pred_check
      _
    $region27: #{tpu_custom_call.1} parent=1 // pred_check_branch
      %67 = sbr.rel (0) target = $region29
    $region28: #{tpu_custom_call.1} parent=1 // pred_region
      _
    $region29: #{tpu_custom_call.1} parent=1 // pred_fallthru
      _
    // Predicated region
    $region30: #{tpu_custom_call.1} parent=1 // pred_check
      _
    $region31: #{tpu_custom_call.1} parent=1 // pred_check_branch
      %69 = sbr.rel (0) target = $region33
    $region32: #{tpu_custom_call.1} parent=1 // pred_region
      %70 = dma.done [#allocation3], 128
    $region33: #{tpu_custom_call.1} parent=1 // pred_fallthru
      _
    // Predicated region
    $region34: #{tpu_custom_call.1} parent=1 // pred_check
      _
    $region35: #{tpu_custom_call.1} parent=1 // pred_check_branch
      %72 = sbr.rel (0) target = $region37
    $region36: #{tpu_custom_call.1} parent=1 // pred_region
      %73 = dma.done [#allocation6], 128
    $region37: #{tpu_custom_call.1} parent=1 // pred_fallthru
      _
    // Predicated region
    $region38: #{tpu_custom_call.1} parent=1 // pred_check
      _
    $region39: #{tpu_custom_call.1} parent=1 // pred_check_branch
      %75 = sbr.rel (0) target = $region41
    $region40: #{tpu_custom_call.1} parent=1 // pred_region
      %76 = dma.done [#allocation6], 9216
    $region41: #{tpu_custom_call.1} parent=1 // pred_fallthru
      _
    // Predicated region
    $region42: #{tpu_custom_call.1} parent=1 // pred_check
      _
    $region43: #{tpu_custom_call.1} parent=1 // pred_check_branch
      %78 = sbr.rel (0) target = $region45
    $region44: #{tpu_custom_call.1} parent=1 // pred_region
      %79 = dma.done [#allocation9], 1024
    $region45: #{tpu_custom_call.1} parent=1 // pred_fallthru
      _
    %v81 = vld [vmem:[%s0] sm:$0xff]
    %v82 = vld [vmem:[#allocation2] sm:$0xff]
    %v83 = vld [vmem:[%s2] sm:$0x1]
    %v84 = vlaneseq
    %v85 = vshrl.u32 %v84, 7
    %v86 = vsub.s32 0, %v85
    %v87 = vrot.slane %v83, %v86
    %89 = vset.pattern.permute.xlu0 0
    %90 = vperm.xlu0 %89, %v81
    %v91 = vpop.permute.xlu0 %90
    %v93 = vmul.f32 %v87, %v91
    %v94 = vld [vmem:[%s2 + $0x1] sm:$0x1]
    %v95 = vlaneseq
    %v96 = vshrl.u32 %v95, 7
    %v97 = vsub.s32 0, %v96
    %v98 = vrot.slane %v94, %v97
    %v99 = vadd.f32 %v93, %v98
    %v100 = vand.u32 2147483647, %v99
    %vm101 = vcmp.le.f32.partialorder %v100, 0.7853982
    %vm102 = vcmp.lt.s32.totalorder %v99, 0
    %v103 = vand.u32 %v99, 2139095040
    %v104 = vshrl.u32 %v103, 23
    %v105 = vsub.s32 %v104, 127
    %v106 = vand.u32 2147483647, %v99
    %v107 = vand.u32 %v106, 8388607
    %v108 = vor.u32 %v107, 8388608
    %v109 = vsub.s32 0, %v108
    %v110 = vadd.s32 %v105, 1
    %vm111 = vcmp.gt.s32.totalorder %v110, 0
    %v112 = vsel %vm111, %v110, 0
    %v113 = vshrl.u32 %v112, 5
    %v114 = vand.u32 %v112, 31
    %v115 = vsub.s32 32, %v114
    %v116 = vshrl.u32 683565275, %v115
    %v117 = vshll.u32 683565275, %v114
    %v118 = vshrl.u32 2475754826, %v115
    %v119 = vor.u32 %v117, %v118
    %v120 = vshll.u32 2475754826, %v114
    %v121 = vshrl.u32 2131351028, %v115
    %v122 = vor.u32 %v120, %v121
    %v123 = vshll.u32 2131351028, %v114
    %v124 = vshrl.u32 2102212464, %v115
    %v125 = vor.u32 %v123, %v124
    %v126 = vshll.u32 2102212464, %v114
    %v127 = vshrl.u32 920167782, %v115
    %v128 = vor.u32 %v126, %v127
    %v129 = vshll.u32 920167782, %v114
    %v130 = vshrl.u32 1326507024, %v115
    %v131 = vor.u32 %v129, %v130
    %vm132 = vcmp.lt.s32.totalorder %v113, 1
    %vm133 = vcmp.lt.s32.totalorder %v113, 2
    %vm134 = vcmp.lt.s32.totalorder %v113, 3
    %vm135 = vcmp.lt.s32.totalorder %v113, 4
    %v136 = vsel %vm132, %v116, %v119
    %v137 = vsel %vm135, %v125, 2102212464
    %v138 = vsel %vm134, %v122, %v137
    %v139 = vsel %vm133, %v136, %v138
    %v140 = vsel %vm132, %v119, %v122
    %v141 = vsel %vm135, %v128, 920167782
    %v142 = vsel %vm134, %v125, %v141
    %v143 = vsel %vm133, %v140, %v142
    %v144 = vsel %vm132, %v122, %v125
    %v145 = vsel %vm135, %v131, 1326507024
    %v146 = vsel %vm134, %v128, %v145
    %v147 = vsel %vm133, %v144, %v146
    %v148 = vshll.u32 %v108, 8
    %v149 = vmul.u32.u64.compose %v148, %v147
    %v150 = vextract.low.u32 %v149
    %v151 = vextract.high.u32 %v149
    %v152 = vmul.u32.u64.compose %v148, %v143
    %v153 = vextract.low.u32 %v152
    %v154 = vextract.high.u32 %v152
    %v155 = vmul.u32 %v148, %v139
    %v156 = vadd.s32 %v151, %v153
    %vm157 = vc.u32 %v151, %v153
    %v158 = vadd.s32 %v154, 1
    %v159 = vsel %vm157, %v158, %v154
    %v160 = vadd.s32 %v155, %v159
    %v161 = vadd.s32 %v160, 536870912
    %v162 = vshrl.u32 %v161, 30
    %v163 = vshll.u32 %v162, 30
    %v164 = vsub.s32 %v160, %v163
    %vm165 = vcmp.lt.s32.totalorder %v164, 0
    %v166 = vsub.s32 0, %v164
    %v167 = vsel %vm165, %v166, %v164
    %v168 = vclz %v167
    %v169 = vsub.s32 %v168, 2
    %vm170 = vcmp.gt.s32.totalorder 0, %v169
    %v171 = vsel %vm170, 0, %v169
    %v172 = vsub.s32 32, %v171
    %v173 = vshll.u32 %v164, %v171
    %v174 = vshrl.u32 %v156, %v172
    %v175 = vor.u32 %v173, %v174
    %v176 = vsub.s32 4294967266, %v171
    %v177 = vadd.s32 %v176, 127
    %v178 = vshll.u32 %v177, 23
    %v179 = vor.u32 4788187, %v178
    %v180 = vand.u32 2147483647, %v179
    %v182 = vcvt.s32.f32 %v175
    %v183 = vmul.f32 %v182, %v180
    %v184 = vxor.u32 %v183, 2147483648
    %v185 = vsel %vm102, %v184, %v183
    %v186 = vsub.s32 4, %v162
    %v187 = vsel %vm102, %v186, %v162
    %v188 = vsel %vm101, %v99, %v185
    %v189 = vsel %vm101, 0, %v187
    %v190 = vcosq.f32.pop %v188
    %v191 = vsinq.f32.pop %v188
    %vm192 = vweird.f32 %v99
    %v193 = vadd.s32 %v189, 3
    %v194 = vand.u32 %v193, 3
    %vm195 = vcmp.lt.s32.totalorder %v194, 2
    %vm196 = vcmp.eq.s32.totalorder %v194, 0
    %v197 = vxor.u32 %v191, 2147483648
    %v198 = vsel %vm196, %v190, %v197
    %vm199 = vcmp.eq.s32.totalorder %v194, 2
    %v200 = vxor.u32 %v190, 2147483648
    %v201 = vsel %vm199, %v200, %v191
    %v202 = vsel %vm195, %v198, %v201
    %v203 = vsel %vm192, nan, %v202
    %v204 = vand.u32 2147483647, %v99
    %vm205 = vcmp.le.f32.partialorder %v204, 0.7853982
    %vm206 = vcmp.lt.s32.totalorder %v99, 0
    %v207 = vand.u32 %v99, 2139095040
    %v208 = vshrl.u32 %v207, 23
    %v209 = vsub.s32 %v208, 127
    %v210 = vand.u32 2147483647, %v99
    %v211 = vand.u32 %v210, 8388607
    %v212 = vor.u32 %v211, 8388608
    %v213 = vsub.s32 0, %v212
    %v214 = vadd.s32 %v209, 1
    %vm215 = vcmp.gt.s32.totalorder %v214, 0
    %v216 = vsel %vm215, %v214, 0
    %v217 = vshrl.u32 %v216, 5
    %v218 = vand.u32 %v216, 31
    %v219 = vsub.s32 32, %v218
    %v220 = vshrl.u32 683565275, %v219
    %v221 = vshll.u32 683565275, %v218
    %v222 = vshrl.u32 2475754826, %v219
    %v223 = vor.u32 %v221, %v222
    %v224 = vshll.u32 2475754826, %v218
    %v225 = vshrl.u32 2131351028, %v219
    %v226 = vor.u32 %v224, %v225
    %v227 = vshll.u32 2131351028, %v218
    %v228 = vshrl.u32 2102212464, %v219
    %v229 = vor.u32 %v227, %v228
    %v230 = vshll.u32 2102212464, %v218
    %v231 = vshrl.u32 920167782, %v219
    %v232 = vor.u32 %v230, %v231
    %v233 = vshll.u32 920167782, %v218
    %v234 = vshrl.u32 1326507024, %v219
    %v235 = vor.u32 %v233, %v234
    %vm236 = vcmp.lt.s32.totalorder %v217, 1
    %vm237 = vcmp.lt.s32.totalorder %v217, 2
    %vm238 = vcmp.lt.s32.totalorder %v217, 3
    %vm239 = vcmp.lt.s32.totalorder %v217, 4
    %v240 = vsel %vm236, %v220, %v223
    %v241 = vsel %vm239, %v229, 2102212464
    %v242 = vsel %vm238, %v226, %v241
    %v243 = vsel %vm237, %v240, %v242
    %v244 = vsel %vm236, %v223, %v226
    %v245 = vsel %vm239, %v232, 920167782
    %v246 = vsel %vm238, %v229, %v245
    %v247 = vsel %vm237, %v244, %v246
    %v248 = vsel %vm236, %v226, %v229
    %v249 = vsel %vm239, %v235, 1326507024
    %v250 = vsel %vm238, %v232, %v249
    %v251 = vsel %vm237, %v248, %v250
    %v252 = vshll.u32 %v212, 8
    %v253 = vmul.u32.u64.compose %v252, %v251
    %v254 = vextract.low.u32 %v253
    %v255 = vextract.high.u32 %v253
    %v256 = vmul.u32.u64.compose %v252, %v247
    %v257 = vextract.low.u32 %v256
    %v258 = vextract.high.u32 %v256
    %v259 = vmul.u32 %v252, %v243
    %v260 = vadd.s32 %v255, %v257
    %vm261 = vc.u32 %v255, %v257
    %v262 = vadd.s32 %v258, 1
    %v263 = vsel %vm261, %v262, %v258
    %v264 = vadd.s32 %v259, %v263
    %v265 = vadd.s32 %v264, 536870912
    %v266 = vshrl.u32 %v265, 30
    %v267 = vshll.u32 %v266, 30
    %v268 = vsub.s32 %v264, %v267
    %vm269 = vcmp.lt.s32.totalorder %v268, 0
    %v270 = vsub.s32 0, %v268
    %v271 = vsel %vm269, %v270, %v268
    %v272 = vclz %v271
    %v273 = vsub.s32 %v272, 2
    %vm274 = vcmp.gt.s32.totalorder 0, %v273
    %v275 = vsel %vm274, 0, %v273
    %v276 = vsub.s32 32, %v275
    %v277 = vshll.u32 %v268, %v275
    %v278 = vshrl.u32 %v260, %v276
    %v279 = vor.u32 %v277, %v278
    %v280 = vsub.s32 4294967266, %v275
    %v281 = vadd.s32 %v280, 127
    %v282 = vshll.u32 %v281, 23
    %v283 = vor.u32 4788187, %v282
    %v284 = vand.u32 2147483647, %v283
    %v286 = vcvt.s32.f32 %v279
    %v287 = vmul.f32 %v286, %v284
    %v288 = vxor.u32 %v287, 2147483648
    %v289 = vsel %vm206, %v288, %v287
    %v290 = vsub.s32 4, %v266
    %v291 = vsel %vm206, %v290, %v266
    %v292 = vsel %vm205, %v99, %v289
    %v293 = vsel %vm205, 0, %v291
    %v294 = vcosq.f32.pop %v292
    %v295 = vsinq.f32.pop %v292
    %vm296 = vweird.f32 %v99
    %v297 = vand.u32 %v293, 3
    %vm298 = vcmp.lt.s32.totalorder %v297, 2
    %vm299 = vcmp.eq.s32.totalorder %v297, 0
    %v300 = vxor.u32 %v295, 2147483648
    %v301 = vsel %vm299, %v294, %v300
    %vm302 = vcmp.eq.s32.totalorder %v297, 2
    %v303 = vxor.u32 %v294, 2147483648
    %v304 = vsel %vm302, %v303, %v295
    %v305 = vsel %vm298, %v301, %v304
    %v306 = vsel %vm296, nan, %v305
    %v307 = vld [vmem:[#allocation5] sm:$0xf]
    %v308 = vld [vmem:[#allocation5 + $0x4] sm:$0xf]
    %v309 = vpack.c.bf16 %v82, %v82
    %v310 = vld [vmem:[%s2 + $0x2] sm:$0x1]
    %v311 = vlaneseq
    %v312 = vshrl.u32 %v311, 7
    %v313 = vsub.s32 0, %v312
    %v314 = vrot.slane %v310, %v313
    %v317 = vunpack.c.l.b16 %v307
    %v318 = vunpack.c.l.b16 %v308
    %v319 = vpack.c.b16 %v318, %v317
    %vm321 = vcmask 130048
    %v323 = vsel %vm321, %v309, 0
    %325 = vmatprep.subr.bf16.mxu0 0
    %326 = vmatpush1.bf16.msra.mxu0 %v319
    %327 = vmatprep.subr.bf16.mxu0 0
    %328 = vmatpush1.bf16.msra.mxu0 0
    %329 = vmatprep.subr.bf16.mxu0 0
    %330 = vmatpush1.bf16.msra.mxu0 0
    %331 = vmatprep.subr.bf16.mxu0 0
    %332 = vmatpush1.bf16.msra.mxu0 0
    %333 = vmatprep.subr.bf16.mxu0 0
    %334 = vmatpush1.bf16.msra.mxu0 0
    %335 = vmatprep.subr.bf16.mxu0 0
    %336 = vmatpush1.bf16.msra.mxu0 0
    %337 = vmatprep.subr.bf16.mxu0 0
    %338 = vmatpush1.bf16.msra.mxu0 0
    %339 = vmatprep.subr.bf16.mxu0 0
    %340 = vmatpush1.bf16.msra.mxu0 0
    %341 = vmatprep.subr.bf16.mxu0 0
    %342 = vmatpush1.bf16.msra.mxu0 0
    %343 = vmatprep.subr.bf16.mxu0 0
    %344 = vmatpush1.bf16.msra.mxu0 0
    %345 = vmatprep.subr.bf16.mxu0 0
    %346 = vmatpush1.bf16.msra.mxu0 0
    %347 = vmatprep.subr.bf16.mxu0 0
    %348 = vmatpush1.bf16.msra.mxu0 0
    %349 = vmatprep.subr.bf16.mxu0 0
    %350 = vmatpush1.bf16.msra.mxu0 0
    %351 = vmatprep.subr.bf16.mxu0 0
    %352 = vmatpush1.bf16.msra.mxu0 0
    %353 = vmatprep.subr.bf16.mxu0 0
    %354 = vmatpush1.bf16.msra.mxu0 0
    %355 = vmatprep.subr.bf16.mxu0 0
    %356 = vmatpush1.bf16.msra.mxu0 0
    %357 = vmatprep.mubr.bf16.mxu0 0
    %358 = vmatmul.mubr.bf16.gmra.mrb[0].mxu0 %v323
    %v359 = vpop.f32.mrb[0].mxu0
    %v360 = vadd.f32 %v314, %v359
    %v361 = vpop.f32.mrb[0].mxu0
    %v362 = vpop.f32.mrb[0].mxu0
    %v363 = vpop.f32.mrb[0].mxu0
    %364 = vdwg.mxu0
    %v365 = vmul.f32 %v360, %v360
    %v366 = vmul.f32 %v365, 0.035677407
    %v367 = vadd.f32 %v366, 0.7978846
    %v368 = vmul.f32 %v360, %v367
    %v369 = vtanh.pop %v368
    %v370 = vmul.f32 %v369, 0.5
    %v371 = vadd.f32 %v370, 0.5
    %v372 = vmul.f32 %v360, %v371
    %v373 = vld [vmem:[#allocation7] sm:$0xf]
    %v374 = vld [vmem:[#allocation7 + $0x4] sm:$0xf]
    %v375 = vld [vmem:[#allocation7 + $0x8] sm:$0xf]
    %v376 = vld [vmem:[#allocation7 + $0xc] sm:$0xf]
    %v377 = vld [vmem:[#allocation7 + $0x10] sm:$0xf]
    %v378 = vld [vmem:[#allocation7 + $0x14] sm:$0xf]
    %v379 = vld [vmem:[#allocation7 + $0x18] sm:$0xf]
    %v380 = vld [vmem:[#allocation7 + $0x1c] sm:$0xf]
    %v381 = vld [vmem:[#allocation7 + $0x20] sm:$0xf]
    %v382 = vld [vmem:[#allocation7 + $0x24] sm:$0xf]
    %v383 = vld [vmem:[#allocation7 + $0x28] sm:$0xf]
    %v384 = vld [vmem:[#allocation7 + $0x2c] sm:$0xf]
    %v385 = vld [vmem:[#allocation7 + $0x30] sm:$0xf]
    %v386 = vld [vmem:[#allocation7 + $0x34] sm:$0xf]
    %v387 = vld [vmem:[#allocation7 + $0x38] sm:$0xf]
    %v388 = vld [vmem:[#allocation7 + $0x3c] sm:$0xf]
    %v389 = vpack.c.bf16 %v372, %v372
    %v390 = vld [vmem:[%s2 + $0x3] sm:$0x1]
    %v391 = vlaneseq
    %v392 = vshrl.u32 %v391, 7
    %v393 = vsub.s32 0, %v392
    %v394 = vrot.slane %v390, %v393
    %v411 = vunpack.c.l.b16 %v373
    %v412 = vunpack.c.l.b16 %v374
    %v413 = vunpack.c.l.b16 %v375
    %v414 = vunpack.c.l.b16 %v376
    %v415 = vunpack.c.l.b16 %v377
    %v416 = vunpack.c.l.b16 %v378
    %v417 = vunpack.c.l.b16 %v379
    %v418 = vunpack.c.l.b16 %v380
    %v419 = vunpack.c.l.b16 %v381
    %v420 = vunpack.c.l.b16 %v382
    %v421 = vunpack.c.l.b16 %v383
    %v422 = vunpack.c.l.b16 %v384
    %v423 = vunpack.c.l.b16 %v385
    %v424 = vunpack.c.l.b16 %v386
    %v425 = vunpack.c.l.b16 %v387
    %v426 = vunpack.c.l.b16 %v388
    %v427 = vpack.c.b16 %v412, %v411
    %v428 = vpack.c.b16 %v414, %v413
    %v429 = vpack.c.b16 %v416, %v415
    %v430 = vpack.c.b16 %v418, %v417
    %v431 = vpack.c.b16 %v420, %v419
    %v432 = vpack.c.b16 %v422, %v421
    %v433 = vpack.c.b16 %v424, %v423
    %v434 = vpack.c.b16 %v426, %v425
    %443 = vmatprep.subr.bf16.mxu0 0
    %444 = vmatpush1.bf16.msra.mxu0 %v427
    %445 = vmatprep.subr.bf16.mxu0 0
    %446 = vmatpush1.bf16.msra.mxu0 %v428
    %447 = vmatprep.subr.bf16.mxu0 0
    %448 = vmatpush1.bf16.msra.mxu0 %v429
    %449 = vmatprep.subr.bf16.mxu0 0
    %450 = vmatpush1.bf16.msra.mxu0 %v430
    %451 = vmatprep.subr.bf16.mxu0 0
    %452 = vmatpush1.bf16.msra.mxu0 %v431
    %453 = vmatprep.subr.bf16.mxu0 0
    %454 = vmatpush1.bf16.msra.mxu0 %v432
    %455 = vmatprep.subr.bf16.mxu0 0
    %456 = vmatpush1.bf16.msra.mxu0 %v433
    %457 = vmatprep.subr.bf16.mxu0 0
    %458 = vmatpush1.bf16.msra.mxu0 %v434
    %459 = vmatprep.subr.bf16.mxu0 0
    %460 = vmatpush1.bf16.msra.mxu0 0
    %461 = vmatprep.subr.bf16.mxu0 0
    %462 = vmatpush1.bf16.msra.mxu0 0
    %463 = vmatprep.subr.bf16.mxu0 0
    %464 = vmatpush1.bf16.msra.mxu0 0
    %465 = vmatprep.subr.bf16.mxu0 0
    %466 = vmatpush1.bf16.msra.mxu0 0
    %467 = vmatprep.subr.bf16.mxu0 0
    %468 = vmatpush1.bf16.msra.mxu0 0
    %469 = vmatprep.subr.bf16.mxu0 0
    %470 = vmatpush1.bf16.msra.mxu0 0
    %471 = vmatprep.subr.bf16.mxu0 0
    %472 = vmatpush1.bf16.msra.mxu0 0
    %473 = vmatprep.subr.bf16.mxu0 0
    %474 = vmatpush1.bf16.msra.mxu0 0
    %475 = vmatprep.mubr.bf16.mxu0 0
    %476 = vmatmul.mubr.bf16.gmra.mrb[0].mxu0 %v389
    %v477 = vpop.f32.mrb[0].mxu0
    %v478 = vadd.f32 %v394, %v477
    %v479 = vpop.f32.mrb[0].mxu0
    %v480 = vpop.f32.mrb[0].mxu0
    %v481 = vpop.f32.mrb[0].mxu0
    %482 = vdwg.mxu0
    %v483 = vmul.f32 %v478, %v478
    %v484 = vmul.f32 %v483, 0.035677407
    %v485 = vadd.f32 %v484, 0.7978846
    %v486 = vmul.f32 %v478, %v485
    %v487 = vtanh.pop %v486
    %v488 = vmul.f32 %v487, 0.5
    %v489 = vadd.f32 %v488, 0.5
    %v490 = vmul.f32 %v478, %v489
    %s491 = scalar_lea.vmem [#allocation7], 64
    %v492 = vld [vmem:[%s491] sm:$0xf]
    %v493 = vld [vmem:[%s491 + $0x4] sm:$0xf]
    %v494 = vld [vmem:[%s491 + $0x8] sm:$0xf]
    %v495 = vld [vmem:[%s491 + $0xc] sm:$0xf]
    %v496 = vld [vmem:[%s491 + $0x10] sm:$0xf]
    %v497 = vld [vmem:[%s491 + $0x14] sm:$0xf]
    %v498 = vld [vmem:[%s491 + $0x18] sm:$0xf]
    %v499 = vld [vmem:[%s491 + $0x1c] sm:$0xf]
    %v500 = vld [vmem:[%s491 + $0x20] sm:$0xf]
    %v501 = vld [vmem:[%s491 + $0x24] sm:$0xf]
    %v502 = vld [vmem:[%s491 + $0x28] sm:$0xf]
    %v503 = vld [vmem:[%s491 + $0x2c] sm:$0xf]
    %v504 = vld [vmem:[%s491 + $0x30] sm:$0xf]
    %v505 = vld [vmem:[%s491 + $0x34] sm:$0xf]
    %v506 = vld [vmem:[%s491 + $0x38] sm:$0xf]
    %v507 = vld [vmem:[%s491 + $0x3c] sm:$0xf]
    %v508 = vpack.c.bf16 %v490, %v490
    %v509 = vld [vmem:[%s2 + $0x4] sm:$0x1]
    %v510 = vlaneseq
    %v511 = vshrl.u32 %v510, 7
    %v512 = vsub.s32 0, %v511
    %v513 = vrot.slane %v509, %v512
    %v530 = vunpack.c.l.b16 %v492
    %v531 = vunpack.c.l.b16 %v493
    %v532 = vunpack.c.l.b16 %v494
    %v533 = vunpack.c.l.b16 %v495
    %v534 = vunpack.c.l.b16 %v496
    %v535 = vunpack.c.l.b16 %v497
    %v536 = vunpack.c.l.b16 %v498
    %v537 = vunpack.c.l.b16 %v499
    %v538 = vunpack.c.l.b16 %v500
    %v539 = vunpack.c.l.b16 %v501
    %v540 = vunpack.c.l.b16 %v502
    %v541 = vunpack.c.l.b16 %v503
    %v542 = vunpack.c.l.b16 %v504
    %v543 = vunpack.c.l.b16 %v505
    %v544 = vunpack.c.l.b16 %v506
    %v545 = vunpack.c.l.b16 %v507
    %v546 = vpack.c.b16 %v531, %v530
    %v547 = vpack.c.b16 %v533, %v532
    %v548 = vpack.c.b16 %v535, %v534
    %v549 = vpack.c.b16 %v537, %v536
    %v550 = vpack.c.b16 %v539, %v538
    %v551 = vpack.c.b16 %v541, %v540
    %v552 = vpack.c.b16 %v543, %v542
    %v553 = vpack.c.b16 %v545, %v544
    %562 = vmatprep.subr.bf16.mxu0 0
    %563 = vmatpush1.bf16.msra.mxu0 %v546
    %564 = vmatprep.subr.bf16.mxu0 0
    %565 = vmatpush1.bf16.msra.mxu0 %v547
    %566 = vmatprep.subr.bf16.mxu0 0
    %567 = vmatpush1.bf16.msra.mxu0 %v548
    %568 = vmatprep.subr.bf16.mxu0 0
    %569 = vmatpush1.bf16.msra.mxu0 %v549
    %570 = vmatprep.subr.bf16.mxu0 0
    %571 = vmatpush1.bf16.msra.mxu0 %v550
    %572 = vmatprep.subr.bf16.mxu0 0
    %573 = vmatpush1.bf16.msra.mxu0 %v551
    %574 = vmatprep.subr.bf16.mxu0 0
    %575 = vmatpush1.bf16.msra.mxu0 %v552
    %576 = vmatprep.subr.bf16.mxu0 0
    %577 = vmatpush1.bf16.msra.mxu0 %v553
    %578 = vmatprep.subr.bf16.mxu0 0
    %579 = vmatpush1.bf16.msra.mxu0 0
    %580 = vmatprep.subr.bf16.mxu0 0
    %581 = vmatpush1.bf16.msra.mxu0 0
    %582 = vmatprep.subr.bf16.mxu0 0
    %583 = vmatpush1.bf16.msra.mxu0 0
    %584 = vmatprep.subr.bf16.mxu0 0
    %585 = vmatpush1.bf16.msra.mxu0 0
    %586 = vmatprep.subr.bf16.mxu0 0
    %587 = vmatpush1.bf16.msra.mxu0 0
    %588 = vmatprep.subr.bf16.mxu0 0
    %589 = vmatpush1.bf16.msra.mxu0 0
    %590 = vmatprep.subr.bf16.mxu0 0
    %591 = vmatpush1.bf16.msra.mxu0 0
    %592 = vmatprep.subr.bf16.mxu0 0
    %593 = vmatpush1.bf16.msra.mxu0 0
    %594 = vmatprep.mubr.bf16.mxu0 0
    %595 = vmatmul.mubr.bf16.gmra.mrb[0].mxu0 %v508
    %v596 = vpop.f32.mrb[0].mxu0
    %v597 = vadd.f32 %v513, %v596
    %v598 = vpop.f32.mrb[0].mxu0
    %v599 = vpop.f32.mrb[0].mxu0
    %v600 = vpop.f32.mrb[0].mxu0
    %601 = vdwg.mxu0
    %v602 = vmul.f32 %v597, %v597
    %v603 = vmul.f32 %v602, 0.035677407
    %v604 = vadd.f32 %v603, 0.7978846
    %v605 = vmul.f32 %v597, %v604
    %v606 = vtanh.pop %v605
    %v607 = vmul.f32 %v606, 0.5
    %v608 = vadd.f32 %v607, 0.5
    %v609 = vmul.f32 %v597, %v608
    %s610 = scalar_lea.vmem [#allocation7], 128
    %v611 = vld [vmem:[%s610] sm:$0xf]
    %v612 = vld [vmem:[%s610 + $0x4] sm:$0xf]
    %v613 = vld [vmem:[%s610 + $0x8] sm:$0xf]
    %v614 = vld [vmem:[%s610 + $0xc] sm:$0xf]
    %v615 = vld [vmem:[%s610 + $0x10] sm:$0xf]
    %v616 = vld [vmem:[%s610 + $0x14] sm:$0xf]
    %v617 = vld [vmem:[%s610 + $0x18] sm:$0xf]
    %v618 = vld [vmem:[%s610 + $0x1c] sm:$0xf]
    %v619 = vld [vmem:[%s610 + $0x20] sm:$0xf]
    %v620 = vld [vmem:[%s610 + $0x24] sm:$0xf]
    %v621 = vld [vmem:[%s610 + $0x28] sm:$0xf]
    %v622 = vld [vmem:[%s610 + $0x2c] sm:$0xf]
    %v623 = vld [vmem:[%s610 + $0x30] sm:$0xf]
    %v624 = vld [vmem:[%s610 + $0x34] sm:$0xf]
    %v625 = vld [vmem:[%s610 + $0x38] sm:$0xf]
    %v626 = vld [vmem:[%s610 + $0x3c] sm:$0xf]
    %v627 = vpack.c.bf16 %v203, %v203
    %s628 = scalar_lea.vmem [#allocation7], 192
    %v629 = vld [vmem:[%s628] sm:$0xf]
    %v630 = vld [vmem:[%s628 + $0x4] sm:$0xf]
    %v631 = vld [vmem:[%s628 + $0x8] sm:$0xf]
    %v632 = vld [vmem:[%s628 + $0xc] sm:$0xf]
    %v633 = vld [vmem:[%s628 + $0x10] sm:$0xf]
    %v634 = vld [vmem:[%s628 + $0x14] sm:$0xf]
    %v635 = vld [vmem:[%s628 + $0x18] sm:$0xf]
    %v636 = vld [vmem:[%s628 + $0x1c] sm:$0xf]
    %v637 = vld [vmem:[%s628 + $0x20] sm:$0xf]
    %v638 = vld [vmem:[%s628 + $0x24] sm:$0xf]
    %v639 = vld [vmem:[%s628 + $0x28] sm:$0xf]
    %v640 = vld [vmem:[%s628 + $0x2c] sm:$0xf]
    %v641 = vld [vmem:[%s628 + $0x30] sm:$0xf]
    %v642 = vld [vmem:[%s628 + $0x34] sm:$0xf]
    %v643 = vld [vmem:[%s628 + $0x38] sm:$0xf]
    %v644 = vld [vmem:[%s628 + $0x3c] sm:$0xf]
    %v645 = vpack.c.bf16 %v306, %v306
    %v662 = vunpack.c.l.b16 %v629
    %v663 = vunpack.c.l.b16 %v630
    %v664 = vunpack.c.l.b16 %v631
    %v665 = vunpack.c.l.b16 %v632
    %v666 = vunpack.c.l.b16 %v633
    %v667 = vunpack.c.l.b16 %v634
    %v668 = vunpack.c.l.b16 %v635
    %v669 = vunpack.c.l.b16 %v636
    %v670 = vunpack.c.l.b16 %v637
    %v671 = vunpack.c.l.b16 %v638
    %v672 = vunpack.c.l.b16 %v639
    %v673 = vunpack.c.l.b16 %v640
    %v674 = vunpack.c.l.b16 %v641
    %v675 = vunpack.c.l.b16 %v642
    %v676 = vunpack.c.l.b16 %v643
    %v677 = vunpack.c.l.b16 %v644
    %v678 = vpack.c.b16 %v663, %v662
    %v679 = vpack.c.b16 %v665, %v664
    %v680 = vpack.c.b16 %v667, %v666
    %v681 = vpack.c.b16 %v669, %v668
    %v682 = vpack.c.b16 %v671, %v670
    %v683 = vpack.c.b16 %v673, %v672
    %v684 = vpack.c.b16 %v675, %v674
    %v685 = vpack.c.b16 %v677, %v676
    %694 = vmatprep.subr.bf16.mxu0 0
    %695 = vmatpush1.bf16.msra.mxu0 %v678
    %696 = vmatprep.subr.bf16.mxu0 0
    %697 = vmatpush1.bf16.msra.mxu0 %v679
    %698 = vmatprep.subr.bf16.mxu0 0
    %699 = vmatpush1.bf16.msra.mxu0 %v680
    %700 = vmatprep.subr.bf16.mxu0 0
    %701 = vmatpush1.bf16.msra.mxu0 %v681
    %702 = vmatprep.subr.bf16.mxu0 0
    %703 = vmatpush1.bf16.msra.mxu0 %v682
    %704 = vmatprep.subr.bf16.mxu0 0
    %705 = vmatpush1.bf16.msra.mxu0 %v683
    %706 = vmatprep.subr.bf16.mxu0 0
    %707 = vmatpush1.bf16.msra.mxu0 %v684
    %708 = vmatprep.subr.bf16.mxu0 0
    %709 = vmatpush1.bf16.msra.mxu0 %v685
    %710 = vmatprep.subr.bf16.mxu0 0
    %711 = vmatpush1.bf16.msra.mxu0 0
    %712 = vmatprep.subr.bf16.mxu0 0
    %713 = vmatpush1.bf16.msra.mxu0 0
    %714 = vmatprep.subr.bf16.mxu0 0
    %715 = vmatpush1.bf16.msra.mxu0 0
    %716 = vmatprep.subr.bf16.mxu0 0
    %717 = vmatpush1.bf16.msra.mxu0 0
    %718 = vmatprep.subr.bf16.mxu0 0
    %719 = vmatpush1.bf16.msra.mxu0 0
    %720 = vmatprep.subr.bf16.mxu0 0
    %721 = vmatpush1.bf16.msra.mxu0 0
    %722 = vmatprep.subr.bf16.mxu0 0
    %723 = vmatpush1.bf16.msra.mxu0 0
    %724 = vmatprep.subr.bf16.mxu0 0
    %725 = vmatpush1.bf16.msra.mxu0 0
    %726 = vmatprep.mubr.bf16.mxu0 0
    %727 = vmatmul.mubr.bf16.gmra.mrb[0].mxu0 %v645
    %v728 = vpop.f32.mrb[0].mxu0
    %v729 = vadd.f32 0.0, %v728
    %v730 = vpop.f32.mrb[0].mxu0
    %v731 = vpop.f32.mrb[0].mxu0
    %v732 = vpop.f32.mrb[0].mxu0
    %733 = vdwg.mxu0
    %v750 = vunpack.c.l.b16 %v611
    %v751 = vunpack.c.l.b16 %v612
    %v752 = vunpack.c.l.b16 %v613
    %v753 = vunpack.c.l.b16 %v614
    %v754 = vunpack.c.l.b16 %v615
    %v755 = vunpack.c.l.b16 %v616
    %v756 = vunpack.c.l.b16 %v617
    %v757 = vunpack.c.l.b16 %v618
    %v758 = vunpack.c.l.b16 %v619
    %v759 = vunpack.c.l.b16 %v620
    %v760 = vunpack.c.l.b16 %v621
    %v761 = vunpack.c.l.b16 %v622
    %v762 = vunpack.c.l.b16 %v623
    %v763 = vunpack.c.l.b16 %v624
    %v764 = vunpack.c.l.b16 %v625
    %v765 = vunpack.c.l.b16 %v626
    %v766 = vpack.c.b16 %v751, %v750
    %v767 = vpack.c.b16 %v753, %v752
    %v768 = vpack.c.b16 %v755, %v754
    %v769 = vpack.c.b16 %v757, %v756
    %v770 = vpack.c.b16 %v759, %v758
    %v771 = vpack.c.b16 %v761, %v760
    %v772 = vpack.c.b16 %v763, %v762
    %v773 = vpack.c.b16 %v765, %v764
    %782 = vmatprep.subr.bf16.mxu0 0
    %783 = vmatpush1.bf16.msra.mxu0 %v766
    %784 = vmatprep.subr.bf16.mxu0 0
    %785 = vmatpush1.bf16.msra.mxu0 %v767
    %786 = vmatprep.subr.bf16.mxu0 0
    %787 = vmatpush1.bf16.msra.mxu0 %v768
    %788 = vmatprep.subr.bf16.mxu0 0
    %789 = vmatpush1.bf16.msra.mxu0 %v769
    %790 = vmatprep.subr.bf16.mxu0 0
    %791 = vmatpush1.bf16.msra.mxu0 %v770
    %792 = vmatprep.subr.bf16.mxu0 0
    %793 = vmatpush1.bf16.msra.mxu0 %v771
    %794 = vmatprep.subr.bf16.mxu0 0
    %795 = vmatpush1.bf16.msra.mxu0 %v772
    %796 = vmatprep.subr.bf16.mxu0 0
    %797 = vmatpush1.bf16.msra.mxu0 %v773
    %798 = vmatprep.subr.bf16.mxu0 0
    %799 = vmatpush1.bf16.msra.mxu0 0
    %800 = vmatprep.subr.bf16.mxu0 0
    %801 = vmatpush1.bf16.msra.mxu0 0
    %802 = vmatprep.subr.bf16.mxu0 0
    %803 = vmatpush1.bf16.msra.mxu0 0
    %804 = vmatprep.subr.bf16.mxu0 0
    %805 = vmatpush1.bf16.msra.mxu0 0
    %806 = vmatprep.subr.bf16.mxu0 0
    %807 = vmatpush1.bf16.msra.mxu0 0
    %808 = vmatprep.subr.bf16.mxu0 0
    %809 = vmatpush1.bf16.msra.mxu0 0
    %810 = vmatprep.subr.bf16.mxu0 0
    %811 = vmatpush1.bf16.msra.mxu0 0
    %812 = vmatprep.subr.bf16.mxu0 0
    %813 = vmatpush1.bf16.msra.mxu0 0
    %814 = vmatprep.mubr.bf16.mxu0 0
    %815 = vmatmul.mubr.bf16.gmra.mrb[0].mxu0 %v627
    %v816 = vpop.f32.mrb[0].mxu0
    %v817 = vadd.f32 %v729, %v816
    %v818 = vpop.f32.mrb[0].mxu0
    %v819 = vpop.f32.mrb[0].mxu0
    %v820 = vpop.f32.mrb[0].mxu0
    %821 = vdwg.mxu0
    %v822 = vld [vmem:[%s2 + $0x5] sm:$0x1]
    %v823 = vlaneseq
    %v824 = vshrl.u32 %v823, 7
    %v825 = vsub.s32 0, %v824
    %v826 = vrot.slane %v822, %v825
    %v827 = vadd.f32 %v817, %v826
    %v828 = vmul.f32 %v827, %v827
    %v829 = vmul.f32 %v828, 0.035677407
    %v830 = vadd.f32 %v829, 0.7978846
    %v831 = vmul.f32 %v827, %v830
    %v832 = vtanh.pop %v831
    %v833 = vmul.f32 %v832, 0.5
    %v834 = vadd.f32 %v833, 0.5
    %v835 = vmul.f32 %v827, %v834
    %s836 = scalar_lea.vmem [#allocation7], 256
    %v837 = vld [vmem:[%s836] sm:$0xf]
    %v838 = vld [vmem:[%s836 + $0x4] sm:$0xf]
    %v839 = vld [vmem:[%s836 + $0x8] sm:$0xf]
    %v840 = vld [vmem:[%s836 + $0xc] sm:$0xf]
    %v841 = vld [vmem:[%s836 + $0x10] sm:$0xf]
    %v842 = vld [vmem:[%s836 + $0x14] sm:$0xf]
    %v843 = vld [vmem:[%s836 + $0x18] sm:$0xf]
    %v844 = vld [vmem:[%s836 + $0x1c] sm:$0xf]
    %v845 = vld [vmem:[%s836 + $0x20] sm:$0xf]
    %v846 = vld [vmem:[%s836 + $0x24] sm:$0xf]
    %v847 = vld [vmem:[%s836 + $0x28] sm:$0xf]
    %v848 = vld [vmem:[%s836 + $0x2c] sm:$0xf]
    %v849 = vld [vmem:[%s836 + $0x30] sm:$0xf]
    %v850 = vld [vmem:[%s836 + $0x34] sm:$0xf]
    %v851 = vld [vmem:[%s836 + $0x38] sm:$0xf]
    %v852 = vld [vmem:[%s836 + $0x3c] sm:$0xf]
    %v853 = vpack.c.bf16 %v835, %v835
    %v854 = vld [vmem:[%s2 + $0x6] sm:$0x1]
    %v855 = vlaneseq
    %v856 = vshrl.u32 %v855, 7
    %v857 = vsub.s32 0, %v856
    %v858 = vrot.slane %v854, %v857
    %v875 = vunpack.c.l.b16 %v837
    %v876 = vunpack.c.l.b16 %v838
    %v877 = vunpack.c.l.b16 %v839
    %v878 = vunpack.c.l.b16 %v840
    %v879 = vunpack.c.l.b16 %v841
    %v880 = vunpack.c.l.b16 %v842
    %v881 = vunpack.c.l.b16 %v843
    %v882 = vunpack.c.l.b16 %v844
    %v883 = vunpack.c.l.b16 %v845
    %v884 = vunpack.c.l.b16 %v846
    %v885 = vunpack.c.l.b16 %v847
    %v886 = vunpack.c.l.b16 %v848
    %v887 = vunpack.c.l.b16 %v849
    %v888 = vunpack.c.l.b16 %v850
    %v889 = vunpack.c.l.b16 %v851
    %v890 = vunpack.c.l.b16 %v852
    %v891 = vpack.c.b16 %v876, %v875
    %v892 = vpack.c.b16 %v878, %v877
    %v893 = vpack.c.b16 %v880, %v879
    %v894 = vpack.c.b16 %v882, %v881
    %v895 = vpack.c.b16 %v884, %v883
    %v896 = vpack.c.b16 %v886, %v885
    %v897 = vpack.c.b16 %v888, %v887
    %v898 = vpack.c.b16 %v890, %v889
    %907 = vmatprep.subr.bf16.mxu0 0
    %908 = vmatpush1.bf16.msra.mxu0 %v891
    %909 = vmatprep.subr.bf16.mxu0 0
    %910 = vmatpush1.bf16.msra.mxu0 %v892
    %911 = vmatprep.subr.bf16.mxu0 0
    %912 = vmatpush1.bf16.msra.mxu0 %v893
    %913 = vmatprep.subr.bf16.mxu0 0
    %914 = vmatpush1.bf16.msra.mxu0 %v894
    %915 = vmatprep.subr.bf16.mxu0 0
    %916 = vmatpush1.bf16.msra.mxu0 %v895
    %917 = vmatprep.subr.bf16.mxu0 0
    %918 = vmatpush1.bf16.msra.mxu0 %v896
    %919 = vmatprep.subr.bf16.mxu0 0
    %920 = vmatpush1.bf16.msra.mxu0 %v897
    %921 = vmatprep.subr.bf16.mxu0 0
    %922 = vmatpush1.bf16.msra.mxu0 %v898
    %923 = vmatprep.subr.bf16.mxu0 0
    %924 = vmatpush1.bf16.msra.mxu0 0
    %925 = vmatprep.subr.bf16.mxu0 0
    %926 = vmatpush1.bf16.msra.mxu0 0
    %927 = vmatprep.subr.bf16.mxu0 0
    %928 = vmatpush1.bf16.msra.mxu0 0
    %929 = vmatprep.subr.bf16.mxu0 0
    %930 = vmatpush1.bf16.msra.mxu0 0
    %931 = vmatprep.subr.bf16.mxu0 0
    %932 = vmatpush1.bf16.msra.mxu0 0
    %933 = vmatprep.subr.bf16.mxu0 0
    %934 = vmatpush1.bf16.msra.mxu0 0
    %935 = vmatprep.subr.bf16.mxu0 0
    %936 = vmatpush1.bf16.msra.mxu0 0
    %937 = vmatprep.subr.bf16.mxu0 0
    %938 = vmatpush1.bf16.msra.mxu0 0
    %939 = vmatprep.mubr.bf16.mxu0 0
    %940 = vmatmul.mubr.bf16.gmra.mrb[0].mxu0 %v853
    %v941 = vpop.f32.mrb[0].mxu0
    %v942 = vadd.f32 %v858, %v941
    %v943 = vpop.f32.mrb[0].mxu0
    %v944 = vpop.f32.mrb[0].mxu0
    %v945 = vpop.f32.mrb[0].mxu0
    %946 = vdwg.mxu0
    %v947 = vmul.f32 %v942, %v942
    %v948 = vmul.f32 %v947, 0.035677407
    %v949 = vadd.f32 %v948, 0.7978846
    %v950 = vmul.f32 %v942, %v949
    %v951 = vtanh.pop %v950
    %v952 = vmul.f32 %v951, 0.5
    %v953 = vadd.f32 %v952, 0.5
    %v954 = vmul.f32 %v942, %v953
    %s955 = scalar_lea.vmem [#allocation7], 320
    %v956 = vld [vmem:[%s955] sm:$0xf]
    %v957 = vld [vmem:[%s955 + $0x4] sm:$0xf]
    %v958 = vld [vmem:[%s955 + $0x8] sm:$0xf]
    %v959 = vld [vmem:[%s955 + $0xc] sm:$0xf]
    %v960 = vld [vmem:[%s955 + $0x10] sm:$0xf]
    %v961 = vld [vmem:[%s955 + $0x14] sm:$0xf]
    %v962 = vld [vmem:[%s955 + $0x18] sm:$0xf]
    %v963 = vld [vmem:[%s955 + $0x1c] sm:$0xf]
    %v964 = vld [vmem:[%s955 + $0x20] sm:$0xf]
    %v965 = vld [vmem:[%s955 + $0x24] sm:$0xf]
    %v966 = vld [vmem:[%s955 + $0x28] sm:$0xf]
    %v967 = vld [vmem:[%s955 + $0x2c] sm:$0xf]
    %v968 = vld [vmem:[%s955 + $0x30] sm:$0xf]
    %v969 = vld [vmem:[%s955 + $0x34] sm:$0xf]
    %v970 = vld [vmem:[%s955 + $0x38] sm:$0xf]
    %v971 = vld [vmem:[%s955 + $0x3c] sm:$0xf]
    %v972 = vpack.c.bf16 %v954, %v954
    %v973 = vld [vmem:[%s2 + $0x7] sm:$0x1]
    %v974 = vlaneseq
    %v975 = vshrl.u32 %v974, 7
    %v976 = vsub.s32 0, %v975
    %v977 = vrot.slane %v973, %v976
    %v994 = vunpack.c.l.b16 %v956
    %v995 = vunpack.c.l.b16 %v957
    %v996 = vunpack.c.l.b16 %v958
    %v997 = vunpack.c.l.b16 %v959
    %v998 = vunpack.c.l.b16 %v960
    %v999 = vunpack.c.l.b16 %v961
    %v1000 = vunpack.c.l.b16 %v962
    %v1001 = vunpack.c.l.b16 %v963
    %v1002 = vunpack.c.l.b16 %v964
    %v1003 = vunpack.c.l.b16 %v965
    %v1004 = vunpack.c.l.b16 %v966
    %v1005 = vunpack.c.l.b16 %v967
    %v1006 = vunpack.c.l.b16 %v968
    %v1007 = vunpack.c.l.b16 %v969
    %v1008 = vunpack.c.l.b16 %v970
    %v1009 = vunpack.c.l.b16 %v971
    %v1010 = vpack.c.b16 %v995, %v994
    %v1011 = vpack.c.b16 %v997, %v996
    %v1012 = vpack.c.b16 %v999, %v998
    %v1013 = vpack.c.b16 %v1001, %v1000
    %v1014 = vpack.c.b16 %v1003, %v1002
    %v1015 = vpack.c.b16 %v1005, %v1004
    %v1016 = vpack.c.b16 %v1007, %v1006
    %v1017 = vpack.c.b16 %v1009, %v1008
    %1026 = vmatprep.subr.bf16.mxu0 0
    %1027 = vmatpush1.bf16.msra.mxu0 %v1010
    %1028 = vmatprep.subr.bf16.mxu0 0
    %1029 = vmatpush1.bf16.msra.mxu0 %v1011
    %1030 = vmatprep.subr.bf16.mxu0 0
    %1031 = vmatpush1.bf16.msra.mxu0 %v1012
    %1032 = vmatprep.subr.bf16.mxu0 0
    %1033 = vmatpush1.bf16.msra.mxu0 %v1013
    %1034 = vmatprep.subr.bf16.mxu0 0
    %1035 = vmatpush1.bf16.msra.mxu0 %v1014
    %1036 = vmatprep.subr.bf16.mxu0 0
    %1037 = vmatpush1.bf16.msra.mxu0 %v1015
    %1038 = vmatprep.subr.bf16.mxu0 0
    %1039 = vmatpush1.bf16.msra.mxu0 %v1016
    %1040 = vmatprep.subr.bf16.mxu0 0
    %1041 = vmatpush1.bf16.msra.mxu0 %v1017
    %1042 = vmatprep.subr.bf16.mxu0 0
    %1043 = vmatpush1.bf16.msra.mxu0 0
    %1044 = vmatprep.subr.bf16.mxu0 0
    %1045 = vmatpush1.bf16.msra.mxu0 0
    %1046 = vmatprep.subr.bf16.mxu0 0
    %1047 = vmatpush1.bf16.msra.mxu0 0
    %1048 = vmatprep.subr.bf16.mxu0 0
    %1049 = vmatpush1.bf16.msra.mxu0 0
    %1050 = vmatprep.subr.bf16.mxu0 0
    %1051 = vmatpush1.bf16.msra.mxu0 0
    %1052 = vmatprep.subr.bf16.mxu0 0
    %1053 = vmatpush1.bf16.msra.mxu0 0
    %1054 = vmatprep.subr.bf16.mxu0 0
    %1055 = vmatpush1.bf16.msra.mxu0 0
    %1056 = vmatprep.subr.bf16.mxu0 0
    %1057 = vmatpush1.bf16.msra.mxu0 0
    %1058 = vmatprep.mubr.bf16.mxu0 0
    %1059 = vmatmul.mubr.bf16.gmra.mrb[0].mxu0 %v972
    %v1060 = vpop.f32.mrb[0].mxu0
    %v1061 = vadd.f32 %v977, %v1060
    %v1062 = vpop.f32.mrb[0].mxu0
    %v1063 = vpop.f32.mrb[0].mxu0
    %v1064 = vpop.f32.mrb[0].mxu0
    %1065 = vdwg.mxu0
    %v1066 = vmul.f32 %v1061, %v1061
    %v1067 = vmul.f32 %v1066, 0.035677407
    %v1068 = vadd.f32 %v1067, 0.7978846
    %v1069 = vmul.f32 %v1061, %v1068
    %v1070 = vtanh.pop %v1069
    %v1071 = vmul.f32 %v1070, 0.5
    %v1072 = vadd.f32 %v1071, 0.5
    %v1073 = vmul.f32 %v1061, %v1072
    %v1074 = vmul.f32 %v609, %v609
    %v1075 = vmul.f32 %v1074, 0.035677407
    %v1076 = vadd.f32 %v1075, 0.7978846
    %v1077 = vmul.f32 %v609, %v1076
    %v1078 = vtanh.pop %v1077
    %v1079 = vmul.f32 %v1078, 0.5
    %v1080 = vadd.f32 %v1079, 0.5
    %v1081 = vmul.f32 %v609, %v1080
    %v1082 = vmul.f32 %v1073, %v1073
    %v1083 = vmul.f32 %v1082, 0.035677407
    %v1084 = vadd.f32 %v1083, 0.7978846
    %v1085 = vmul.f32 %v1073, %v1084
    %v1086 = vtanh.pop %v1085
    %v1087 = vmul.f32 %v1086, 0.5
    %v1088 = vadd.f32 %v1087, 0.5
    %v1089 = vmul.f32 %v1073, %v1088
    %s1090 = scalar_lea.vmem [#allocation7], 384
    %v1091 = vld [vmem:[%s1090] sm:$0xf]
    %v1092 = vld [vmem:[%s1090 + $0x4] sm:$0xf]
    %v1093 = vld [vmem:[%s1090 + $0x8] sm:$0xf]
    %v1094 = vld [vmem:[%s1090 + $0xc] sm:$0xf]
    %v1095 = vld [vmem:[%s1090 + $0x10] sm:$0xf]
    %v1096 = vld [vmem:[%s1090 + $0x14] sm:$0xf]
    %v1097 = vld [vmem:[%s1090 + $0x18] sm:$0xf]
    %v1098 = vld [vmem:[%s1090 + $0x1c] sm:$0xf]
    %v1099 = vld [vmem:[%s1090 + $0x20] sm:$0xf]
    %v1100 = vld [vmem:[%s1090 + $0x24] sm:$0xf]
    %v1101 = vld [vmem:[%s1090 + $0x28] sm:$0xf]
    %v1102 = vld [vmem:[%s1090 + $0x2c] sm:$0xf]
    %v1103 = vld [vmem:[%s1090 + $0x30] sm:$0xf]
    %v1104 = vld [vmem:[%s1090 + $0x34] sm:$0xf]
    %v1105 = vld [vmem:[%s1090 + $0x38] sm:$0xf]
    %v1106 = vld [vmem:[%s1090 + $0x3c] sm:$0xf]
    %v1107 = vpack.c.bf16 %v1081, %v1081
    %s1108 = scalar_lea.vmem [#allocation7], 448
    %v1109 = vld [vmem:[%s1108] sm:$0xf]
    %v1110 = vld [vmem:[%s1108 + $0x4] sm:$0xf]
    %v1111 = vld [vmem:[%s1108 + $0x8] sm:$0xf]
    %v1112 = vld [vmem:[%s1108 + $0xc] sm:$0xf]
    %v1113 = vld [vmem:[%s1108 + $0x10] sm:$0xf]
    %v1114 = vld [vmem:[%s1108 + $0x14] sm:$0xf]
    %v1115 = vld [vmem:[%s1108 + $0x18] sm:$0xf]
    %v1116 = vld [vmem:[%s1108 + $0x1c] sm:$0xf]
    %v1117 = vld [vmem:[%s1108 + $0x20] sm:$0xf]
    %v1118 = vld [vmem:[%s1108 + $0x24] sm:$0xf]
    %v1119 = vld [vmem:[%s1108 + $0x28] sm:$0xf]
    %v1120 = vld [vmem:[%s1108 + $0x2c] sm:$0xf]
    %v1121 = vld [vmem:[%s1108 + $0x30] sm:$0xf]
    %v1122 = vld [vmem:[%s1108 + $0x34] sm:$0xf]
    %v1123 = vld [vmem:[%s1108 + $0x38] sm:$0xf]
    %v1124 = vld [vmem:[%s1108 + $0x3c] sm:$0xf]
    %v1125 = vpack.c.bf16 %v1089, %v1089
    %v1142 = vunpack.c.l.b16 %v1109
    %v1143 = vunpack.c.l.b16 %v1110
    %v1144 = vunpack.c.l.b16 %v1111
    %v1145 = vunpack.c.l.b16 %v1112
    %v1146 = vunpack.c.l.b16 %v1113
    %v1147 = vunpack.c.l.b16 %v1114
    %v1148 = vunpack.c.l.b16 %v1115
    %v1149 = vunpack.c.l.b16 %v1116
    %v1150 = vunpack.c.l.b16 %v1117
    %v1151 = vunpack.c.l.b16 %v1118
    %v1152 = vunpack.c.l.b16 %v1119
    %v1153 = vunpack.c.l.b16 %v1120
    %v1154 = vunpack.c.l.b16 %v1121
    %v1155 = vunpack.c.l.b16 %v1122
    %v1156 = vunpack.c.l.b16 %v1123
    %v1157 = vunpack.c.l.b16 %v1124
    %v1158 = vpack.c.b16 %v1143, %v1142
    %v1159 = vpack.c.b16 %v1145, %v1144
    %v1160 = vpack.c.b16 %v1147, %v1146
    %v1161 = vpack.c.b16 %v1149, %v1148
    %v1162 = vpack.c.b16 %v1151, %v1150
    %v1163 = vpack.c.b16 %v1153, %v1152
    %v1164 = vpack.c.b16 %v1155, %v1154
    %v1165 = vpack.c.b16 %v1157, %v1156
    %1174 = vmatprep.subr.bf16.mxu0 0
    %1175 = vmatpush1.bf16.msra.mxu0 %v1158
    %1176 = vmatprep.subr.bf16.mxu0 0
    %1177 = vmatpush1.bf16.msra.mxu0 %v1159
    %1178 = vmatprep.subr.bf16.mxu0 0
    %1179 = vmatpush1.bf16.msra.mxu0 %v1160
    %1180 = vmatprep.subr.bf16.mxu0 0
    %1181 = vmatpush1.bf16.msra.mxu0 %v1161
    %1182 = vmatprep.subr.bf16.mxu0 0
    %1183 = vmatpush1.bf16.msra.mxu0 %v1162
    %1184 = vmatprep.subr.bf16.mxu0 0
    %1185 = vmatpush1.bf16.msra.mxu0 %v1163
    %1186 = vmatprep.subr.bf16.mxu0 0
    %1187 = vmatpush1.bf16.msra.mxu0 %v1164
    %1188 = vmatprep.subr.bf16.mxu0 0
    %1189 = vmatpush1.bf16.msra.mxu0 %v1165
    %1190 = vmatprep.subr.bf16.mxu0 0
    %1191 = vmatpush1.bf16.msra.mxu0 0
    %1192 = vmatprep.subr.bf16.mxu0 0
    %1193 = vmatpush1.bf16.msra.mxu0 0
    %1194 = vmatprep.subr.bf16.mxu0 0
    %1195 = vmatpush1.bf16.msra.mxu0 0
    %1196 = vmatprep.subr.bf16.mxu0 0
    %1197 = vmatpush1.bf16.msra.mxu0 0
    %1198 = vmatprep.subr.bf16.mxu0 0
    %1199 = vmatpush1.bf16.msra.mxu0 0
    %1200 = vmatprep.subr.bf16.mxu0 0
    %1201 = vmatpush1.bf16.msra.mxu0 0
    %1202 = vmatprep.subr.bf16.mxu0 0
    %1203 = vmatpush1.bf16.msra.mxu0 0
    %1204 = vmatprep.subr.bf16.mxu0 0
    %1205 = vmatpush1.bf16.msra.mxu0 0
    %1206 = vmatprep.mubr.bf16.mxu0 0
    %1207 = vmatmul.mubr.bf16.gmra.mrb[0].mxu0 %v1125
    %v1208 = vpop.f32.mrb[0].mxu0
    %v1209 = vadd.f32 0.0, %v1208
    %v1210 = vpop.f32.mrb[0].mxu0
    %v1211 = vpop.f32.mrb[0].mxu0
    %v1212 = vpop.f32.mrb[0].mxu0
    %1213 = vdwg.mxu0
    %v1230 = vunpack.c.l.b16 %v1091
    %v1231 = vunpack.c.l.b16 %v1092
    %v1232 = vunpack.c.l.b16 %v1093
    %v1233 = vunpack.c.l.b16 %v1094
    %v1234 = vunpack.c.l.b16 %v1095
    %v1235 = vunpack.c.l.b16 %v1096
    %v1236 = vunpack.c.l.b16 %v1097
    %v1237 = vunpack.c.l.b16 %v1098
    %v1238 = vunpack.c.l.b16 %v1099
    %v1239 = vunpack.c.l.b16 %v1100
    %v1240 = vunpack.c.l.b16 %v1101
    %v1241 = vunpack.c.l.b16 %v1102
    %v1242 = vunpack.c.l.b16 %v1103
    %v1243 = vunpack.c.l.b16 %v1104
    %v1244 = vunpack.c.l.b16 %v1105
    %v1245 = vunpack.c.l.b16 %v1106
    %v1246 = vpack.c.b16 %v1231, %v1230
    %v1247 = vpack.c.b16 %v1233, %v1232
    %v1248 = vpack.c.b16 %v1235, %v1234
    %v1249 = vpack.c.b16 %v1237, %v1236
    %v1250 = vpack.c.b16 %v1239, %v1238
    %v1251 = vpack.c.b16 %v1241, %v1240
    %v1252 = vpack.c.b16 %v1243, %v1242
    %v1253 = vpack.c.b16 %v1245, %v1244
    %1262 = vmatprep.subr.bf16.mxu0 0
    %1263 = vmatpush1.bf16.msra.mxu0 %v1246
    %1264 = vmatprep.subr.bf16.mxu0 0
    %1265 = vmatpush1.bf16.msra.mxu0 %v1247
    %1266 = vmatprep.subr.bf16.mxu0 0
    %1267 = vmatpush1.bf16.msra.mxu0 %v1248
    %1268 = vmatprep.subr.bf16.mxu0 0
    %1269 = vmatpush1.bf16.msra.mxu0 %v1249
    %1270 = vmatprep.subr.bf16.mxu0 0
    %1271 = vmatpush1.bf16.msra.mxu0 %v1250
    %1272 = vmatprep.subr.bf16.mxu0 0
    %1273 = vmatpush1.bf16.msra.mxu0 %v1251
    %1274 = vmatprep.subr.bf16.mxu0 0
    %1275 = vmatpush1.bf16.msra.mxu0 %v1252
    %1276 = vmatprep.subr.bf16.mxu0 0
    %1277 = vmatpush1.bf16.msra.mxu0 %v1253
    %1278 = vmatprep.subr.bf16.mxu0 0
    %1279 = vmatpush1.bf16.msra.mxu0 0
    %1280 = vmatprep.subr.bf16.mxu0 0
    %1281 = vmatpush1.bf16.msra.mxu0 0
    %1282 = vmatprep.subr.bf16.mxu0 0
    %1283 = vmatpush1.bf16.msra.mxu0 0
    %1284 = vmatprep.subr.bf16.mxu0 0
    %1285 = vmatpush1.bf16.msra.mxu0 0
    %1286 = vmatprep.subr.bf16.mxu0 0
    %1287 = vmatpush1.bf16.msra.mxu0 0
    %1288 = vmatprep.subr.bf16.mxu0 0
    %1289 = vmatpush1.bf16.msra.mxu0 0
    %1290 = vmatprep.subr.bf16.mxu0 0
    %1291 = vmatpush1.bf16.msra.mxu0 0
    %1292 = vmatprep.subr.bf16.mxu0 0
    %1293 = vmatpush1.bf16.msra.mxu0 0
    %1294 = vmatprep.mubr.bf16.mxu0 0
    %1295 = vmatmul.mubr.bf16.gmra.mrb[0].mxu0 %v1107
    %v1296 = vpop.f32.mrb[0].mxu0
    %v1297 = vadd.f32 %v1209, %v1296
    %v1298 = vpop.f32.mrb[0].mxu0
    %v1299 = vpop.f32.mrb[0].mxu0
    %v1300 = vpop.f32.mrb[0].mxu0
    %1301 = vdwg.mxu0
    %v1302 = vld [vmem:[%s2 + $0x8] sm:$0x1]
    %v1303 = vlaneseq
    %v1304 = vshrl.u32 %v1303, 7
    %v1305 = vsub.s32 0, %v1304
    %v1306 = vrot.slane %v1302, %v1305
    %v1307 = vadd.f32 %v1297, %v1306
    %v1308 = vmul.f32 %v1307, %v1307
    %v1309 = vmul.f32 %v1308, 0.035677407
    %v1310 = vadd.f32 %v1309, 0.7978846
    %v1311 = vmul.f32 %v1307, %v1310
    %v1312 = vtanh.pop %v1311
    %v1313 = vmul.f32 %v1312, 0.5
    %v1314 = vadd.f32 %v1313, 0.5
    %v1315 = vmul.f32 %v1307, %v1314
    %s1316 = scalar_lea.vmem [#allocation7], 512
    %v1317 = vld [vmem:[%s1316] sm:$0xf]
    %v1318 = vld [vmem:[%s1316 + $0x4] sm:$0xf]
    %v1319 = vld [vmem:[%s1316 + $0x8] sm:$0xf]
    %v1320 = vld [vmem:[%s1316 + $0xc] sm:$0xf]
    %v1321 = vld [vmem:[%s1316 + $0x10] sm:$0xf]
    %v1322 = vld [vmem:[%s1316 + $0x14] sm:$0xf]
    %v1323 = vld [vmem:[%s1316 + $0x18] sm:$0xf]
    %v1324 = vld [vmem:[%s1316 + $0x1c] sm:$0xf]
    %v1325 = vld [vmem:[%s1316 + $0x20] sm:$0xf]
    %v1326 = vld [vmem:[%s1316 + $0x24] sm:$0xf]
    %v1327 = vld [vmem:[%s1316 + $0x28] sm:$0xf]
    %v1328 = vld [vmem:[%s1316 + $0x2c] sm:$0xf]
    %v1329 = vld [vmem:[%s1316 + $0x30] sm:$0xf]
    %v1330 = vld [vmem:[%s1316 + $0x34] sm:$0xf]
    %v1331 = vld [vmem:[%s1316 + $0x38] sm:$0xf]
    %v1332 = vld [vmem:[%s1316 + $0x3c] sm:$0xf]
    %v1333 = vpack.c.bf16 %v1315, %v1315
    %v1334 = vld [vmem:[%s2 + $0x9] sm:$0x1]
    %v1335 = vlaneseq
    %v1336 = vshrl.u32 %v1335, 7
    %v1337 = vsub.s32 0, %v1336
    %v1338 = vrot.slane %v1334, %v1337
    %v1355 = vunpack.c.l.b16 %v1317
    %v1356 = vunpack.c.l.b16 %v1318
    %v1357 = vunpack.c.l.b16 %v1319
    %v1358 = vunpack.c.l.b16 %v1320
    %v1359 = vunpack.c.l.b16 %v1321
    %v1360 = vunpack.c.l.b16 %v1322
    %v1361 = vunpack.c.l.b16 %v1323
    %v1362 = vunpack.c.l.b16 %v1324
    %v1363 = vunpack.c.l.b16 %v1325
    %v1364 = vunpack.c.l.b16 %v1326
    %v1365 = vunpack.c.l.b16 %v1327
    %v1366 = vunpack.c.l.b16 %v1328
    %v1367 = vunpack.c.l.b16 %v1329
    %v1368 = vunpack.c.l.b16 %v1330
    %v1369 = vunpack.c.l.b16 %v1331
    %v1370 = vunpack.c.l.b16 %v1332
    %v1371 = vpack.c.b16 %v1356, %v1355
    %v1372 = vpack.c.b16 %v1358, %v1357
    %v1373 = vpack.c.b16 %v1360, %v1359
    %v1374 = vpack.c.b16 %v1362, %v1361
    %v1375 = vpack.c.b16 %v1364, %v1363
    %v1376 = vpack.c.b16 %v1366, %v1365
    %v1377 = vpack.c.b16 %v1368, %v1367
    %v1378 = vpack.c.b16 %v1370, %v1369
    %1387 = vmatprep.subr.bf16.mxu0 0
    %1388 = vmatpush1.bf16.msra.mxu0 %v1371
    %1389 = vmatprep.subr.bf16.mxu0 0
    %1390 = vmatpush1.bf16.msra.mxu0 %v1372
    %1391 = vmatprep.subr.bf16.mxu0 0
    %1392 = vmatpush1.bf16.msra.mxu0 %v1373
    %1393 = vmatprep.subr.bf16.mxu0 0
    %1394 = vmatpush1.bf16.msra.mxu0 %v1374
    %1395 = vmatprep.subr.bf16.mxu0 0
    %1396 = vmatpush1.bf16.msra.mxu0 %v1375
    %1397 = vmatprep.subr.bf16.mxu0 0
    %1398 = vmatpush1.bf16.msra.mxu0 %v1376
    %1399 = vmatprep.subr.bf16.mxu0 0
    %1400 = vmatpush1.bf16.msra.mxu0 %v1377
    %1401 = vmatprep.subr.bf16.mxu0 0
    %1402 = vmatpush1.bf16.msra.mxu0 %v1378
    %1403 = vmatprep.subr.bf16.mxu0 0
    %1404 = vmatpush1.bf16.msra.mxu0 0
    %1405 = vmatprep.subr.bf16.mxu0 0
    %1406 = vmatpush1.bf16.msra.mxu0 0
    %1407 = vmatprep.subr.bf16.mxu0 0
    %1408 = vmatpush1.bf16.msra.mxu0 0
    %1409 = vmatprep.subr.bf16.mxu0 0
    %1410 = vmatpush1.bf16.msra.mxu0 0
    %1411 = vmatprep.subr.bf16.mxu0 0
    %1412 = vmatpush1.bf16.msra.mxu0 0
    %1413 = vmatprep.subr.bf16.mxu0 0
    %1414 = vmatpush1.bf16.msra.mxu0 0
    %1415 = vmatprep.subr.bf16.mxu0 0
    %1416 = vmatpush1.bf16.msra.mxu0 0
    %1417 = vmatprep.subr.bf16.mxu0 0
    %1418 = vmatpush1.bf16.msra.mxu0 0
    %1419 = vmatprep.mubr.bf16.mxu0 0
    %1420 = vmatmul.mubr.bf16.gmra.mrb[0].mxu0 %v1333
    %v1421 = vpop.f32.mrb[0].mxu0
    %v1422 = vadd.f32 %v1338, %v1421
    %v1423 = vpop.f32.mrb[0].mxu0
    %v1424 = vpop.f32.mrb[0].mxu0
    %v1425 = vpop.f32.mrb[0].mxu0
    %1426 = vdwg.mxu0
    %v1427 = vmul.f32 %v1422, %v1422
    %v1428 = vmul.f32 %v1427, 0.035677407
    %v1429 = vadd.f32 %v1428, 0.7978846
    %v1430 = vmul.f32 %v1422, %v1429
    %v1431 = vtanh.pop %v1430
    %v1432 = vmul.f32 %v1431, 0.5
    %v1433 = vadd.f32 %v1432, 0.5
    %v1434 = vmul.f32 %v1422, %v1433
    %v1435 = vld [vmem:[#allocation8] sm:$0xf]
    %v1436 = vld [vmem:[#allocation8 + $0x4] sm:$0xf]
    %v1437 = vld [vmem:[#allocation8 + $0x8] sm:$0xf]
    %v1438 = vld [vmem:[#allocation8 + $0xc] sm:$0xf]
    %v1439 = vld [vmem:[#allocation8 + $0x10] sm:$0xf]
    %v1440 = vld [vmem:[#allocation8 + $0x14] sm:$0xf]
    %v1441 = vld [vmem:[#allocation8 + $0x18] sm:$0xf]
    %v1442 = vld [vmem:[#allocation8 + $0x1c] sm:$0xf]
    %v1443 = vld [vmem:[#allocation8 + $0x20] sm:$0xf]
    %v1444 = vld [vmem:[#allocation8 + $0x24] sm:$0xf]
    %v1445 = vld [vmem:[#allocation8 + $0x28] sm:$0xf]
    %v1446 = vld [vmem:[#allocation8 + $0x2c] sm:$0xf]
    %v1447 = vld [vmem:[#allocation8 + $0x30] sm:$0xf]
    %v1448 = vld [vmem:[#allocation8 + $0x34] sm:$0xf]
    %v1449 = vld [vmem:[#allocation8 + $0x38] sm:$0xf]
    %v1450 = vld [vmem:[#allocation8 + $0x3c] sm:$0xf]
    %v1451 = vpack.c.bf16 %v1434, %v1434
    %v1452 = vld [vmem:[%s6] sm:$0x1]
    %v1454 = vlaneseq
    %v1455 = vshrl.u32 %v1454, 7
    %v1456 = vsub.s32 0, %v1455
    %v1457 = vrot.slane %v1452, %v1456
    %v1475 = vunpack.c.l.b16 %v1435
    %v1476 = vunpack.c.l.b16 %v1436
    %v1477 = vunpack.c.l.b16 %v1437
    %v1478 = vunpack.c.l.b16 %v1438
    %v1479 = vunpack.c.l.b16 %v1439
    %v1480 = vunpack.c.l.b16 %v1440
    %v1481 = vunpack.c.l.b16 %v1441
    %v1482 = vunpack.c.l.b16 %v1442
    %v1483 = vunpack.c.l.b16 %v1443
    %v1484 = vunpack.c.l.b16 %v1444
    %v1485 = vunpack.c.l.b16 %v1445
    %v1486 = vunpack.c.l.b16 %v1446
    %v1487 = vunpack.c.l.b16 %v1447
    %v1488 = vunpack.c.l.b16 %v1448
    %v1489 = vunpack.c.l.b16 %v1449
    %v1490 = vunpack.c.l.b16 %v1450
    %v1491 = vpack.c.b16 %v1476, %v1475
    %v1492 = vpack.c.b16 %v1478, %v1477
    %v1493 = vpack.c.b16 %v1480, %v1479
    %v1494 = vpack.c.b16 %v1482, %v1481
    %v1495 = vpack.c.b16 %v1484, %v1483
    %v1496 = vpack.c.b16 %v1486, %v1485
    %v1497 = vpack.c.b16 %v1488, %v1487
    %v1498 = vpack.c.b16 %v1490, %v1489
    %1507 = vmatprep.subr.bf16.mxu0 0
    %1508 = vmatpush1.bf16.msra.mxu0 %v1491
    %1509 = vmatprep.subr.bf16.mxu0 0
    %1510 = vmatpush1.bf16.msra.mxu0 %v1492
    %1511 = vmatprep.subr.bf16.mxu0 0
    %1512 = vmatpush1.bf16.msra.mxu0 %v1493
    %1513 = vmatprep.subr.bf16.mxu0 0
    %1514 = vmatpush1.bf16.msra.mxu0 %v1494
    %1515 = vmatprep.subr.bf16.mxu0 0
    %1516 = vmatpush1.bf16.msra.mxu0 %v1495
    %1517 = vmatprep.subr.bf16.mxu0 0
    %1518 = vmatpush1.bf16.msra.mxu0 %v1496
    %1519 = vmatprep.subr.bf16.mxu0 0
    %1520 = vmatpush1.bf16.msra.mxu0 %v1497
    %1521 = vmatprep.subr.bf16.mxu0 0
    %1522 = vmatpush1.bf16.msra.mxu0 %v1498
    %1523 = vmatprep.subr.bf16.mxu0 0
    %1524 = vmatpush1.bf16.msra.mxu0 0
    %1525 = vmatprep.subr.bf16.mxu0 0
    %1526 = vmatpush1.bf16.msra.mxu0 0
    %1527 = vmatprep.subr.bf16.mxu0 0
    %1528 = vmatpush1.bf16.msra.mxu0 0
    %1529 = vmatprep.subr.bf16.mxu0 0
    %1530 = vmatpush1.bf16.msra.mxu0 0
    %1531 = vmatprep.subr.bf16.mxu0 0
    %1532 = vmatpush1.bf16.msra.mxu0 0
    %1533 = vmatprep.subr.bf16.mxu0 0
    %1534 = vmatpush1.bf16.msra.mxu0 0
    %1535 = vmatprep.subr.bf16.mxu0 0
    %1536 = vmatpush1.bf16.msra.mxu0 0
    %1537 = vmatprep.subr.bf16.mxu0 0
    %1538 = vmatpush1.bf16.msra.mxu0 0
    %1539 = vmatprep.mubr.bf16.mxu0 0
    %1540 = vmatmul.mubr.bf16.gmra.mrb[0].mxu0 %v1451
    %v1541 = vpop.f32.mrb[0].mxu0
    %v1542 = vadd.f32 %v1457, %v1541
    %v1543 = vpop.f32.mrb[0].mxu0
    %v1544 = vpop.f32.mrb[0].mxu0
    %v1545 = vpop.f32.mrb[0].mxu0
    %1546 = vdwg.mxu0
    %1547 = vst [vmem:[#allocation10] sm:$0xff] %v1542
    // Predicated region
    $region46: #{tpu_custom_call.1} parent=1 // pred_check
      _
    $region47: #{tpu_custom_call.1} parent=1 // pred_check_branch
      %1549 = sbr.rel (0) target = $region49
    $region48: #{tpu_custom_call.1} parent=1 // pred_region
      %s1551 = ssub.s32 128, 128
      %1552 = vsyncadd [#allocation4], %s1551
      %s1554 = sshll.u32 [#allocation10], 4
      %s1555 = int_to_ptr.vmem [resolvable:$true] %s1554
      %1557 = dma.vmem_to_hbm [thread:$0]  %s1555, 128, %s7, [#allocation4]
    $region49: #{tpu_custom_call.1} parent=1 // pred_fallthru
      _
    // Predicated region
    $region50: #{tpu_custom_call.1} parent=1 // pred_check
      _
    $region51: #{tpu_custom_call.1} parent=1 // pred_check_branch
      %1559 = sbr.rel (0) target = $region53
    $region52: #{tpu_custom_call.1} parent=1 // pred_region
      %1560 = dma.done [#allocation4], 128
    $region53: #{tpu_custom_call.1} parent=1 // pred_fallthru
      _
    %1561 = vsyncpa [#allocation3], 1
    %1562 = vsyncpa [#allocation6], 1
    %1563 = vsyncpa [#allocation9], 1
    %1564 = vsyncpa [#allocation4], 1

</llo_original>
